<compile_context>
chip_gen: v6e
topology: v6e:2x2x1
jax: 0.10.0
libtpu: 0.0.40
codegen_flags: <defaults>
</compile_context>

<pallas_src>
import math
import jax
import jax.numpy as jnp
from jax.experimental import pallas as pl
from jax.experimental.pallas import tpu as pltpu

# ---- config (mirrors __C of MCAN, small synthetic sizes) -------------------
HIDDEN_SIZE = 32
MULTI_HEAD = 4
HIDDEN_SIZE_HEAD = HIDDEN_SIZE // MULTI_HEAD
FF_SIZE = HIDDEN_SIZE * 4
LN_EPS = 1e-6
NEG_INF = -1e9


# ---- in-kernel math helpers -------------------------------------------------
def _layer_norm(z, gamma, beta):
    # MCAN LayerNorm: unbiased std (Bessel correction), eps added to std.
    mean = jnp.mean(z, axis=-1, keepdims=True)
    var = jnp.sum((z - mean) ** 2, axis=-1, keepdims=True) / (z.shape[-1] - 1)
    inv = pl.reciprocal(jnp.sqrt(var) + LN_EPS, approx=True)
    return gamma * (z - mean) * inv + beta


# ---- the Pallas kernel ------------------------------------------------------
def mca_kernel(x_ref, y_ref, xbias_ref, ybias_ref, hmx_ref, hmy_ref,
               wqkv1_ref, bqkv1_ref, wsq_ref, wkv2_ref, bkv2_ref,
               wf1_ref, bf1_ref, wf2_ref, vec_ref, out_ref):
    bt, Sy, H = y_ref.shape
    Mx = x_ref.shape[0]          # bt * Sx  (x/out are passed flattened)
    Sx = Mx // bt

    x2 = x_ref[...]                                  # (bt*Sx, H) f32
    y2 = y_ref[...].reshape(bt * Sy, H)              # (bt*Sy, H) f32
    xbias = xbias_ref[...]                           # (bt, 1, MH*Sx) additive
    ybias = ybias_ref[...]                           # (bt, 1, MH*Sy)
    hmx = hmx_ref[...]                               # (MH*Sx, H) f32 0/1
    hmy = hmy_ref[...]                               # (MH*Sy, H) f32 0/1

    wqkv1 = wqkv1_ref[...]                           # (H, 3H) bf16, q scale-folded
    bqkv1 = bqkv1_ref[...]                           # (1, 3H) f32
    wsq = wsq_ref[...]                               # (3, H, H) bf16: [w1m, w2q, w2m]
    wkv2 = wkv2_ref[...]                             # (H, 2H) bf16
    bkv2 = bkv2_ref[...]                             # (1, 2H) f32
    wf1 = wf1_ref[...]                               # (H, FF) bf16
    bf1 = bf1_ref[...]                               # (1, FF) f32
    wf2 = wf2_ref[...]                               # (FF, H) bf16
    vec = vec_ref[...]                               # (10, H) f32
    b_q2, b_m1, b_m2, b_f2 = vec[0:1], vec[1:2], vec[2:3], vec[3:4]
    g1, be1 = vec[4:5], vec[5:6]
    g2, be2 = vec[6:7], vec[7:8]
    g3, be3 = vec[8:9], vec[9:10]

    def attention_core(q, k, v, bias_t, hmask, wm, bm, Sq, Sk):
        # q already carries the 1/sqrt(d_head) scale (folded into its weights).
        q3 = q.astype(jnp.bfloat16).reshape(bt, Sq, H)
        k3 = k.reshape(bt, Sk, H)
        v3 = v.reshape(bt, Sk, H)
        hb = jnp.broadcast_to(hmask[None], (bt, MULTI_HEAD * Sk, H))
        # Head fusion: tile K/V per head along the key axis and zero the hidden
        # columns outside each head.  Masking is done in f32, single bf16 cast.
        kt = (jnp.concatenate([k3] * MULTI_HEAD, axis=1) * hb).astype(jnp.bfloat16)
        # Append the 0/1 head indicator as extra columns so the softmax
        # numerator (E@V) and per-head denominator (E@mask) come out of ONE
        # matmul: columns 0:H = numerator, H:2H = denominator.
        v_and_one = jnp.concatenate(
            [jnp.concatenate([v3] * MULTI_HEAD, axis=1) * hb, hb],
            axis=-1).astype(jnp.bfloat16)            # (bt, MH*Sk, 2H)

        s = jnp.einsum("bqh,bkh->bqk", q3, kt,
                       preferred_element_type=jnp.float32) + bias_t
        # Global row max across the head blocks: a per-head shift is only
        # needed to avoid overflow; underflow would require a head max to
        # trail the global max by ~88 nats (far beyond this module's range).
        m = jnp.max(s, axis=-1, keepdims=True)
        e16 = jnp.exp(s - m).astype(jnp.bfloat16)

        nd = jnp.einsum("bqk,bkh->bqh", e16, v_and_one,
                        preferred_element_type=jnp.float32)    # (bt, Sq, 2H)
        nd2 = nd.reshape(bt * Sq, 2 * H)
        att = nd2[:, :H] * pl.reciprocal(nd2[:, H:], approx=True)
        return jnp.dot(att.astype(jnp.bfloat16), wm,
                       preferred_element_type=jnp.float32) + bm

    # x = norm1(x + dropout1(mhatt1(x, x, x, x_mask)))   [dropout = identity]
    qkv = jnp.dot(x2.astype(jnp.bfloat16), wqkv1,
                  preferred_element_type=jnp.float32) + bqkv1        # (bt*Sx, 3H)
    att1 = attention_core(qkv[:, :H], qkv[:, H:2 * H], qkv[:, 2 * H:],
                          xbias, hmx, wsq[0], b_m1, Sx, Sx)
    x2 = _layer_norm(x2 + att1, g1, be1)

    # x = norm2(x + dropout2(mhatt2(y, y, x, y_mask)))
    q2 = jnp.dot(x2.astype(jnp.bfloat16), wsq[1],
                 preferred_element_type=jnp.float32) + b_q2          # (bt*Sx, H)
    kv = jnp.dot(y2.astype(jnp.bfloat16), wkv2,
                 preferred_element_type=jnp.float32) + bkv2          # (bt*Sy, 2H)
    att2 = attention_core(q2, kv[:, :H], kv[:, H:],
                          ybias, hmy, wsq[2], b_m2, Sx, Sy)
    x2 = _layer_norm(x2 + att2, g2, be2)

    # x = norm3(x + dropout3(ffn(x)))    ffn = Linear(ReLU(Linear(x)))
    h = jnp.maximum(
        jnp.dot(x2.astype(jnp.bfloat16), wf1,
                preferred_element_type=jnp.float32) + bf1, 0.0)
    ffn = jnp.dot(h.astype(jnp.bfloat16), wf2,
                  preferred_element_type=jnp.float32) + b_f2
    x2 = _layer_norm(x2 + ffn, g3, be3)

    # Lane-dense block store, no reshape in front of it.
    out_ref[...] = x2.astype(out_ref.dtype)


# ---- wrapper-side helpers ---------------------------------------------------
def _head_mask(Sk):
    # (MULTI_HEAD*Sk, H) 0/1 indicator: row h*Sk+j "belongs" to head h,
    # hidden column d belongs to head d // HIDDEN_SIZE_HEAD.
    r = jnp.arange(MULTI_HEAD * Sk)[:, None]
    c = jnp.arange(HIDDEN_SIZE)[None, :]
    lo = (c // HIDDEN_SIZE_HEAD) * Sk
    return ((r >= lo) & (r < lo + Sk)).astype(jnp.float32)


def _pack_params(params):
    scale = 1.0 / math.sqrt(HIDDEN_SIZE_HEAD)
    # Self-attention: fused [Q|K|V] projection, scale folded into Q.
    w_qkv1 = jnp.concatenate([params["w1q"] * scale, params["w1k"],
                              params["w1v"]], axis=1).astype(jnp.bfloat16)   # (H,3H)
    b_qkv1 = jnp.concatenate([params["b1q"] * scale, params["b1k"],
                              params["b1v"]], axis=1)                        # (1,3H) f32
    # Square (H,H) weights: [merge1, q2 (scale folded), merge2].
    wsq = jnp.stack([params["w1m"], params["w2q"] * scale,
                     params["w2m"]]).astype(jnp.bfloat16)                    # (3,H,H)
    # Cross-attention: fused [K|V] projection from y.
    w_kv2 = jnp.concatenate([params["w2k"], params["w2v"]],
                            axis=1).astype(jnp.bfloat16)                     # (H,2H)
    b_kv2 = jnp.concatenate([params["b2k"], params["b2v"]], axis=1)          # (1,2H)
    wf1 = params["wf1"].astype(jnp.bfloat16)                                 # (H,FF)
    bf1 = params["bf1"]                                                      # (1,FF)
    wf2 = params["wf2"].astype(jnp.bfloat16)                                 # (FF,H)
    vec = jnp.concatenate([params["b2q"] * scale, params["b1m"],
                           params["b2m"], params["bf2"],
                           params["g1"], params["be1"],
                           params["g2"], params["be2"],
                           params["g3"], params["be3"]], axis=0)             # (10,H)
    return w_qkv1, b_qkv1, wsq, w_kv2, b_kv2, wf1, bf1, wf2, vec


def _choose_bt(B, Sx, Sy):
    H, MH, FF = HIDDEN_SIZE, MULTI_HEAD, FF_SIZE
    # Rough f32 bytes of per-batch intermediates live inside one grid step.
    per_batch = 4 * (8 * Sx * H + 2 * Sy * H
                     + 6 * MH * Sx * H + 6 * MH * Sy * H
                     + 4 * Sx * MH * Sx + 4 * Sx * MH * Sy
                     + 2 * Sx * FF)
    cap = max(1, (16 << 20) // per_batch)   # keep per-step footprint ~<16 MiB
    divisors = [d for d in range(1, B + 1) if B % d == 0]
    # bt must keep the flattened (bt*Sx, H) block legal: sublane dim %8==0
    # (or the block is the full array, i.e. bt == B).
    valid = [d for d in divisors
             if d <= cap and ((d * Sx) % 8 == 0 or d == B)]
    if not valid:
        valid = [B]
    # Prefer >= 2 grid steps so ("parallel",) shards across v7x's 2 TCs,
    # while keeping each step as fat as possible.
    multi = [d for d in valid if d <= B // 2]
    return max(multi) if multi else max(valid)


def mca_forward(x, y, x_mask, y_mask, params, bt=None):
    B, Sx, H = x.shape
    Sy = y.shape[1]
    assert H == HIDDEN_SIZE
    if bt is None:
        bt = _choose_bt(B, Sx, Sy)
    assert B % bt == 0, "batch must be divisible by the batch tile"
    assert (bt * Sx) % 8 == 0 or bt == B

    w_qkv1, b_qkv1, wsq, w_kv2, b_kv2, wf1, bf1, wf2, vec = _pack_params(params)

    # Additive attention-mask bias, pre-tiled across heads: (B, 1, MH*S).
    xbias = jnp.tile(x_mask.astype(jnp.float32) * NEG_INF, (1, 1, MULTI_HEAD))
    ybias = jnp.tile(y_mask.astype(jnp.float32) * NEG_INF, (1, 1, MULTI_HEAD))
    # Constant head-indicator masks, hoisted out of the kernel.
    hmx = _head_mask(Sx)
    hmy = _head_mask(Sy)

    x_flat = x.reshape(B * Sx, H)   # lane-dense (M, H) slab for input & output

    def full_spec(shape):
        n = len(shape)
        return pl.BlockSpec(tuple(shape), lambda g, _n=n: (0,) * _n)

    out_flat = pl.pallas_call(
        mca_kernel,
        out_shape=jax.ShapeDtypeStruct((B * Sx, H), jnp.float32),
        grid=(B // bt,),
        in_specs=[
            pl.BlockSpec((bt * Sx, H), lambda g: (g, 0)),                   # x (flat)
            pl.BlockSpec((bt, Sy, H), lambda g: (g, 0, 0)),                 # y
            pl.BlockSpec((bt, 1, MULTI_HEAD * Sx), lambda g: (g, 0, 0)),    # x bias
            pl.BlockSpec((bt, 1, MULTI_HEAD * Sy), lambda g: (g, 0, 0)),    # y bias
            full_spec(hmx.shape), full_spec(hmy.shape),
            full_spec(w_qkv1.shape), full_spec(b_qkv1.shape),
            full_spec(wsq.shape), full_spec(w_kv2.shape), full_spec(b_kv2.shape),
            full_spec(wf1.shape), full_spec(bf1.shape), full_spec(wf2.shape),
            full_spec(vec.shape),
        ],
        out_specs=pl.BlockSpec((bt * Sx, H), lambda g: (g, 0)),
        compiler_params=pltpu.CompilerParams(
            dimension_semantics=("parallel",),
            vmem_limit_bytes=48 * 1024 * 1024),
    )(x_flat, y, xbias, ybias, hmx, hmy,
      w_qkv1, b_qkv1, wsq, w_kv2, b_kv2, wf1, bf1, wf2, vec)

    return out_flat.reshape(B, Sx, H)


# ---- deterministic parameter init ------------------------------------------
def init_params(key):
    params = {}
    keys = jax.random.split(key, 32)
    ki = iter(range(32))

    def w(shape):
        return 0.05 * jax.random.normal(keys[next(ki)], shape, jnp.float32)

    for pfx in ("1", "2"):  # two MHAtt blocks
        for name in ("q", "k", "v", "m"):
            params[f"w{pfx}{name}"] = w((HIDDEN_SIZE, HIDDEN_SIZE))
            params[f"b{pfx}{name}"] = w((1, HIDDEN_SIZE))
    params["wf1"] = w((HIDDEN_SIZE, FF_SIZE))
    params["bf1"] = w((1, FF_SIZE))
    params["wf2"] = w((FF_SIZE, HIDDEN_SIZE))
    params["bf2"] = w((1, HIDDEN_SIZE))
    for i in ("1", "2", "3"):  # LayerNorm a_2=ones, b_2=zeros
        params[f"g{i}"] = jnp.ones((1, HIDDEN_SIZE), jnp.float32)
        params[f"be{i}"] = jnp.zeros((1, HIDDEN_SIZE), jnp.float32)
    return params


# ---- pure-JAX reference (for a correctness check, full f32) ------------------
def mca_reference(x, y, x_mask, y_mask, p):
    def mh(q_in, kv_in, mask, Wq, bq, Wk, bk, Wv, bv, Wm, bm):
        q = q_in @ Wq + bq
        k = kv_in @ Wk + bk
        v = kv_in @ Wv + bv
        B, Sq, _ = q.shape
        Sk = k.shape[1]
        qh = q.reshape(B, Sq, MULTI_HEAD, HIDDEN_SIZE_HEAD).transpose(0, 2, 1, 3)
        kh = k.reshape(B, Sk, MULTI_HEAD, HIDDEN_SIZE_HEAD).transpose(0, 2, 1, 3)
        vh = v.reshape(B, Sk, MULTI_HEAD, HIDDEN_SIZE_HEAD).transpose(0, 2, 1, 3)
        scores = jnp.einsum("bhqd,bhkd->bhqk", qh, kh) / math.sqrt(HIDDEN_SIZE_HEAD)
        scores = jnp.where(mask[:, None, None, :] > 0.5, -1e9, scores)
        pr = jax.nn.softmax(scores, axis=-1)
        att = jnp.einsum("bhqk,bhkd->bhqd", pr, vh)
        att = att.transpose(0, 2, 1, 3).reshape(B, Sq, HIDDEN_SIZE)
        return att @ Wm + bm

    def ln(z, g, b):
        mean = z.mean(-1, keepdims=True)
        std = jnp.sqrt(((z - mean) ** 2).sum(-1, keepdims=True) / (z.shape[-1] - 1))
        return g * (z - mean) / (std + LN_EPS) + b

    xm = x_mask[:, 0, :]
    ym = y_mask[:, 0, :]
    x1 = ln(x + mh(x, x, xm, p["w1q"], p["b1q"], p["w1k"], p["b1k"],
                   p["w1v"], p["b1v"], p["w1m"], p["b1m"]), p["g1"], p["be1"])
    x2 = ln(x1 + mh(x1, y, ym, p["w2q"], p["b2q"], p["w2k"], p["b2k"],
                    p["w2v"], p["b2v"], p["w2m"], p["b2m"]), p["g2"], p["be2"])
    h = jnp.maximum(x2 @ p["wf1"] + p["bf1"], 0.0)
    return ln(x2 + h @ p["wf2"] + p["bf2"], p["g3"], p["be3"])


# ---- main -------------------------------------------------------------------
if __name__ == "__main__":
    key = jax.random.PRNGKey(0)
    kx, ky, kp = jax.random.split(key, 3)

    B, Sx, Sy = 2, 8, 12
    x = jax.random.normal(kx, (B, Sx, HIDDEN_SIZE), jnp.float32)
    y = jax.random.normal(ky, (B, Sy, HIDDEN_SIZE), jnp.float32)
    # 1.0 marks padded positions (masked_fill -> -1e9), as in MCAN.
    x_mask = jnp.zeros((B, 1, Sx), jnp.float32).at[:, :, -2:].set(1.0)
    y_mask = jnp.zeros((B, 1, Sy), jnp.float32).at[:, :, -3:].set(1.0)

    params = init_params(kp)

    out = mca_forward(x, y, x_mask, y_mask, params)
    out = jax.block_until_ready(out)

    ref = mca_reference(x, y, x_mask, y_mask, params)
    assert out.shape == (B, Sx, HIDDEN_SIZE)
    # Kernel uses bf16 MXU operands (f32 accumulate) and approximate
    # reciprocals, so compare against the f32 reference at bf16-level tolerance.
    assert jnp.allclose(out, ref, atol=2e-2, rtol=2e-2), "Pallas vs reference mismatch"

    print("KERNEL_OK")
</pallas_src>

<mosaic_0001>
module attributes {stable_mosaic.version = 11 : i64} {
  func.func @mca_kernel(%arg0: i32, %arg1: memref<8x32xf32, #tpu.memory_space<vmem>>, %arg2: memref<1x12x32xf32, #tpu.memory_space<vmem>>, %arg3: memref<1x1x32xf32, #tpu.memory_space<vmem>>, %arg4: memref<1x1x48xf32, #tpu.memory_space<vmem>>, %arg5: memref<32x32xf32, #tpu.memory_space<vmem>>, %arg6: memref<48x32xf32, #tpu.memory_space<vmem>>, %arg7: memref<32x96xbf16, #tpu.memory_space<vmem>>, %arg8: memref<1x96xf32, #tpu.memory_space<vmem>>, %arg9: memref<3x32x32xbf16, #tpu.memory_space<vmem>>, %arg10: memref<32x64xbf16, #tpu.memory_space<vmem>>, %arg11: memref<1x64xf32, #tpu.memory_space<vmem>>, %arg12: memref<32x128xbf16, #tpu.memory_space<vmem>>, %arg13: memref<1x128xf32, #tpu.memory_space<vmem>>, %arg14: memref<128x32xbf16, #tpu.memory_space<vmem>>, %arg15: memref<10x32xf32, #tpu.memory_space<vmem>>, %arg16: memref<8x32xf32, #tpu.memory_space<vmem>>) attributes {dimension_semantics = [#tpu.dimension_semantics<parallel>], iteration_bounds = array<i64: 2>, scalar_prefetch = 0 : i64, scratch_operands = 0 : i64, tpu.core_type = #tpu.core_type<tc>, window_params = [{transform_indices = @transform_0, window_bounds = array<i64: 8, 32>}, {transform_indices = @transform_1, window_bounds = array<i64: 1, 12, 32>}, {transform_indices = @transform_2, window_bounds = array<i64: 1, 1, 32>}, {transform_indices = @transform_3, window_bounds = array<i64: 1, 1, 48>}, {pipeline_mode = #tpu.pipeline_mode<synchronous>, transform_indices = @transform_4, window_bounds = array<i64: 32, 32>}, {pipeline_mode = #tpu.pipeline_mode<synchronous>, transform_indices = @transform_5, window_bounds = array<i64: 48, 32>}, {pipeline_mode = #tpu.pipeline_mode<synchronous>, transform_indices = @transform_6, window_bounds = array<i64: 32, 96>}, {pipeline_mode = #tpu.pipeline_mode<synchronous>, transform_indices = @transform_7, window_bounds = array<i64: 1, 96>}, {pipeline_mode = #tpu.pipeline_mode<synchronous>, transform_indices = @transform_8, window_bounds = array<i64: 3, 32, 32>}, {pipeline_mode = #tpu.pipeline_mode<synchronous>, transform_indices = @transform_9, window_bounds = array<i64: 32, 64>}, {pipeline_mode = #tpu.pipeline_mode<synchronous>, transform_indices = @transform_10, window_bounds = array<i64: 1, 64>}, {pipeline_mode = #tpu.pipeline_mode<synchronous>, transform_indices = @transform_11, window_bounds = array<i64: 32, 128>}, {pipeline_mode = #tpu.pipeline_mode<synchronous>, transform_indices = @transform_12, window_bounds = array<i64: 1, 128>}, {pipeline_mode = #tpu.pipeline_mode<synchronous>, transform_indices = @transform_13, window_bounds = array<i64: 128, 32>}, {pipeline_mode = #tpu.pipeline_mode<synchronous>, transform_indices = @transform_14, window_bounds = array<i64: 10, 32>}, {transform_indices = @transform_15, window_bounds = array<i64: 8, 32>}]} {
    %c0 = arith.constant 0 : index
    %c0_0 = arith.constant 0 : index
    %0 = vector.load %arg1[%c0, %c0_0] : memref<8x32xf32, #tpu.memory_space<vmem>>, vector<8x32xf32>
    %c0_1 = arith.constant 0 : index
    %c0_2 = arith.constant 0 : index
    %c0_3 = arith.constant 0 : index
    %1 = vector.load %arg2[%c0_1, %c0_2, %c0_3] : memref<1x12x32xf32, #tpu.memory_space<vmem>>, vector<1x12x32xf32>
    %2 = vector.shape_cast %1 : vector<1x12x32xf32> to vector<12x32xf32>
    %c0_4 = arith.constant 0 : index
    %c0_5 = arith.constant 0 : index
    %c0_6 = arith.constant 0 : index
    %3 = vector.load %arg3[%c0_4, %c0_5, %c0_6] : memref<1x1x32xf32, #tpu.memory_space<vmem>>, vector<1x1x32xf32>
    %c0_7 = arith.constant 0 : index
    %c0_8 = arith.constant 0 : index
    %c0_9 = arith.constant 0 : index
    %4 = vector.load %arg4[%c0_7, %c0_8, %c0_9] : memref<1x1x48xf32, #tpu.memory_space<vmem>>, vector<1x1x48xf32>
    %c0_10 = arith.constant 0 : index
    %c0_11 = arith.constant 0 : index
    %5 = vector.load %arg5[%c0_10, %c0_11] : memref<32x32xf32, #tpu.memory_space<vmem>>, vector<32x32xf32>
    %c0_12 = arith.constant 0 : index
    %c0_13 = arith.constant 0 : index
    %6 = vector.load %arg6[%c0_12, %c0_13] : memref<48x32xf32, #tpu.memory_space<vmem>>, vector<48x32xf32>
    %c0_14 = arith.constant 0 : index
    %c0_15 = arith.constant 0 : index
    %7 = vector.load %arg7[%c0_14, %c0_15] : memref<32x96xbf16, #tpu.memory_space<vmem>>, vector<32x96xbf16>
    %c0_16 = arith.constant 0 : index
    %c0_17 = arith.constant 0 : index
    %8 = vector.load %arg8[%c0_16, %c0_17] : memref<1x96xf32, #tpu.memory_space<vmem>>, vector<1x96xf32>
    %c0_18 = arith.constant 0 : index
    %c0_19 = arith.constant 0 : index
    %c0_20 = arith.constant 0 : index
    %9 = vector.load %arg9[%c0_18, %c0_19, %c0_20] : memref<3x32x32xbf16, #tpu.memory_space<vmem>>, vector<3x32x32xbf16>
    %c0_21 = arith.constant 0 : index
    %c0_22 = arith.constant 0 : index
    %10 = vector.load %arg10[%c0_21, %c0_22] : memref<32x64xbf16, #tpu.memory_space<vmem>>, vector<32x64xbf16>
    %c0_23 = arith.constant 0 : index
    %c0_24 = arith.constant 0 : index
    %11 = vector.load %arg11[%c0_23, %c0_24] : memref<1x64xf32, #tpu.memory_space<vmem>>, vector<1x64xf32>
    %c0_25 = arith.constant 0 : index
    %c0_26 = arith.constant 0 : index
    %12 = vector.load %arg12[%c0_25, %c0_26] : memref<32x128xbf16, #tpu.memory_space<vmem>>, vector<32x128xbf16>
    %c0_27 = arith.constant 0 : index
    %c0_28 = arith.constant 0 : index
    %13 = vector.load %arg13[%c0_27, %c0_28] : memref<1x128xf32, #tpu.memory_space<vmem>>, vector<1x128xf32>
    %c0_29 = arith.constant 0 : index
    %c0_30 = arith.constant 0 : index
    %14 = vector.load %arg14[%c0_29, %c0_30] : memref<128x32xbf16, #tpu.memory_space<vmem>>, vector<128x32xbf16>
    %c0_31 = arith.constant 0 : index
    %c0_32 = arith.constant 0 : index
    %15 = vector.load %arg15[%c0_31, %c0_32] : memref<10x32xf32, #tpu.memory_space<vmem>>, vector<10x32xf32>
    %16 = vector.extract_strided_slice %15 {offsets = [0, 0], sizes = [1, 32], strides = [1, 1]} : vector<10x32xf32> to vector<1x32xf32>
    %17 = vector.extract_strided_slice %15 {offsets = [1, 0], sizes = [1, 32], strides = [1, 1]} : vector<10x32xf32> to vector<1x32xf32>
    %18 = vector.extract_strided_slice %15 {offsets = [2, 0], sizes = [1, 32], strides = [1, 1]} : vector<10x32xf32> to vector<1x32xf32>
    %19 = vector.extract_strided_slice %15 {offsets = [3, 0], sizes = [1, 32], strides = [1, 1]} : vector<10x32xf32> to vector<1x32xf32>
    %20 = vector.extract_strided_slice %15 {offsets = [4, 0], sizes = [1, 32], strides = [1, 1]} : vector<10x32xf32> to vector<1x32xf32>
    %21 = vector.extract_strided_slice %15 {offsets = [5, 0], sizes = [1, 32], strides = [1, 1]} : vector<10x32xf32> to vector<1x32xf32>
    %22 = vector.extract_strided_slice %15 {offsets = [6, 0], sizes = [1, 32], strides = [1, 1]} : vector<10x32xf32> to vector<1x32xf32>
    %23 = vector.extract_strided_slice %15 {offsets = [7, 0], sizes = [1, 32], strides = [1, 1]} : vector<10x32xf32> to vector<1x32xf32>
    %24 = vector.extract_strided_slice %15 {offsets = [8, 0], sizes = [1, 32], strides = [1, 1]} : vector<10x32xf32> to vector<1x32xf32>
    %25 = vector.extract_strided_slice %15 {offsets = [9, 0], sizes = [1, 32], strides = [1, 1]} : vector<10x32xf32> to vector<1x32xf32>
    %26 = arith.truncf %0 : vector<8x32xf32> to vector<8x32xbf16>
    %cst = arith.constant dense<0.000000e+00> : vector<8x96xf32>
    %27 = tpu.matmul %26, %7, %cst {dimension_numbers = #tpu.dot_dimension_numbers<[1], [0], [0], [1], [0, 0, 1, 1], [], []>} : vector<8x32xbf16>, vector<32x96xbf16>, vector<8x96xf32> -> vector<8x96xf32>
    %28 = vector.broadcast %8 : vector<1x96xf32> to vector<8x96xf32>
    %29 = arith.addf %27, %28 : vector<8x96xf32>
    %30 = vector.extract_strided_slice %29 {offsets = [0, 0], sizes = [8, 32], strides = [1, 1]} : vector<8x96xf32> to vector<8x32xf32>
    %31 = vector.extract_strided_slice %29 {offsets = [0, 32], sizes = [8, 32], strides = [1, 1]} : vector<8x96xf32> to vector<8x32xf32>
    %32 = vector.extract_strided_slice %29 {offsets = [0, 64], sizes = [8, 32], strides = [1, 1]} : vector<8x96xf32> to vector<8x32xf32>
    %33 = vector.extract_strided_slice %9 {offsets = [0, 0, 0], sizes = [1, 32, 32], strides = [1, 1, 1]} : vector<3x32x32xbf16> to vector<1x32x32xbf16>
    %34 = vector.shape_cast %33 : vector<1x32x32xbf16> to vector<32x32xbf16>
    %35 = arith.truncf %30 : vector<8x32xf32> to vector<8x32xbf16>
    %36 = vector.shape_cast %35 : vector<8x32xbf16> to vector<1x8x32xbf16>
    %37 = vector.shape_cast %31 : vector<8x32xf32> to vector<1x8x32xf32>
    %38 = vector.shape_cast %32 : vector<8x32xf32> to vector<1x8x32xf32>
    %39 = vector.shape_cast %5 : vector<32x32xf32> to vector<1x32x32xf32>
    %40 = tpu.concatenate %37, %37, %37, %37 in 1 : vector<1x8x32xf32>, vector<1x8x32xf32>, vector<1x8x32xf32>, vector<1x8x32xf32> -> vector<1x32x32xf32>
    %41 = arith.mulf %40, %39 : vector<1x32x32xf32>
    %42 = arith.truncf %41 : vector<1x32x32xf32> to vector<1x32x32xbf16>
    %43 = tpu.concatenate %38, %38, %38, %38 in 1 : vector<1x8x32xf32>, vector<1x8x32xf32>, vector<1x8x32xf32>, vector<1x8x32xf32> -> vector<1x32x32xf32>
    %44 = arith.mulf %43, %39 : vector<1x32x32xf32>
    %45 = tpu.concatenate %44, %39 in 2 : vector<1x32x32xf32>, vector<1x32x32xf32> -> vector<1x32x64xf32>
    %46 = arith.truncf %45 : vector<1x32x64xf32> to vector<1x32x64xbf16>
    "tpu.trace_start"() <{level = 10 : i32, message = "bqh,bkh->bqk"}> : () -> ()
    %cst_33 = arith.constant dense<0.000000e+00> : vector<1x8x32xf32>
    %47 = tpu.matmul %36, %42, %cst_33 {dimension_numbers = #tpu.dot_dimension_numbers<[2], [2], [1], [1], [0, 0, 0, 1, 1, 1], [0], [0]>} : vector<1x8x32xbf16>, vector<1x32x32xbf16>, vector<1x8x32xf32> -> vector<1x8x32xf32>
    "tpu.trace_stop"() : () -> ()
    %48 = vector.broadcast %3 : vector<1x1x32xf32> to vector<1x8x32xf32>
    %49 = arith.addf %47, %48 : vector<1x8x32xf32>
    %cst_34 = arith.constant dense<0xFF800000> : vector<1x8xf32>
    %50 = vector.multi_reduction <maximumf>, %49, %cst_34 [2] : vector<1x8x32xf32> to vector<1x8xf32>
    %51 = vector.shape_cast %50 : vector<1x8xf32> to vector<1x8x1xf32>
    %52 = vector.broadcast %51 : vector<1x8x1xf32> to vector<1x8x32xf32>
    %53 = arith.subf %49, %52 : vector<1x8x32xf32>
    %54 = math.exp %53 : vector<1x8x32xf32>
    %55 = arith.truncf %54 : vector<1x8x32xf32> to vector<1x8x32xbf16>
    "tpu.trace_start"() <{level = 10 : i32, message = "bqk,bkh->bqh"}> : () -> ()
    %cst_35 = arith.constant dense<0.000000e+00> : vector<1x8x64xf32>
    %56 = tpu.matmul %55, %46, %cst_35 {dimension_numbers = #tpu.dot_dimension_numbers<[2], [1], [1], [2], [0, 0, 0, 1, 1, 2], [0], [0]>} : vector<1x8x32xbf16>, vector<1x32x64xbf16>, vector<1x8x64xf32> -> vector<1x8x64xf32>
    "tpu.trace_stop"() : () -> ()
    %57 = vector.shape_cast %56 : vector<1x8x64xf32> to vector<8x64xf32>
    %58 = vector.extract_strided_slice %57 {offsets = [0, 0], sizes = [8, 32], strides = [1, 1]} : vector<8x64xf32> to vector<8x32xf32>
    %59 = vector.extract_strided_slice %57 {offsets = [0, 32], sizes = [8, 32], strides = [1, 1]} : vector<8x64xf32> to vector<8x32xf32>
    %60 = tpu.reciprocal %59 {approx = true} : vector<8x32xf32> -> vector<8x32xf32>
    %61 = arith.mulf %58, %60 : vector<8x32xf32>
    %62 = arith.truncf %61 : vector<8x32xf32> to vector<8x32xbf16>
    %cst_36 = arith.constant dense<0.000000e+00> : vector<8x32xf32>
    %63 = tpu.matmul %62, %34, %cst_36 {dimension_numbers = #tpu.dot_dimension_numbers<[1], [0], [0], [1], [0, 0, 1, 1], [], []>} : vector<8x32xbf16>, vector<32x32xbf16>, vector<8x32xf32> -> vector<8x32xf32>
    %64 = vector.broadcast %17 : vector<1x32xf32> to vector<8x32xf32>
    %65 = arith.addf %63, %64 : vector<8x32xf32>
    %66 = arith.addf %0, %65 : vector<8x32xf32>
    %cst_37 = arith.constant dense<0.000000e+00> : vector<8xf32>
    %67 = vector.multi_reduction <add>, %66, %cst_37 [1] : vector<8x32xf32> to vector<8xf32>
    %68 = vector.shape_cast %67 : vector<8xf32> to vector<8x1xf32>
    %cst_38 = arith.constant 3.200000e+01 : f32
    %69 = vector.broadcast %cst_38 : f32 to vector<8x1xf32>
    %70 = arith.divf %68, %69 : vector<8x1xf32>
    %71 = vector.broadcast %70 : vector<8x1xf32> to vector<8x32xf32>
    %72 = arith.subf %66, %71 : vector<8x32xf32>
    %73 = arith.mulf %72, %72 : vector<8x32xf32>
    %cst_39 = arith.constant dense<0.000000e+00> : vector<8xf32>
    %74 = vector.multi_reduction <add>, %73, %cst_39 [1] : vector<8x32xf32> to vector<8xf32>
    %75 = vector.shape_cast %74 : vector<8xf32> to vector<8x1xf32>
    %cst_40 = arith.constant 3.100000e+01 : f32
    %76 = vector.broadcast %cst_40 : f32 to vector<8x1xf32>
    %77 = arith.divf %75, %76 : vector<8x1xf32>
    %78 = math.sqrt %77 : vector<8x1xf32>
    %cst_41 = arith.constant 9.99999997E-7 : f32
    %79 = vector.broadcast %cst_41 : f32 to vector<8x1xf32>
    %80 = arith.addf %78, %79 : vector<8x1xf32>
    %81 = tpu.reciprocal %80 {approx = true} : vector<8x1xf32> -> vector<8x1xf32>
    %82 = vector.broadcast %70 : vector<8x1xf32> to vector<8x32xf32>
    %83 = arith.subf %66, %82 : vector<8x32xf32>
    %84 = vector.broadcast %20 : vector<1x32xf32> to vector<8x32xf32>
    %85 = arith.mulf %84, %83 : vector<8x32xf32>
    %86 = vector.broadcast %81 : vector<8x1xf32> to vector<8x32xf32>
    %87 = arith.mulf %85, %86 : vector<8x32xf32>
    %88 = vector.broadcast %21 : vector<1x32xf32> to vector<8x32xf32>
    %89 = arith.addf %87, %88 : vector<8x32xf32>
    %90 = arith.truncf %89 : vector<8x32xf32> to vector<8x32xbf16>
    %91 = vector.extract_strided_slice %9 {offsets = [1, 0, 0], sizes = [1, 32, 32], strides = [1, 1, 1]} : vector<3x32x32xbf16> to vector<1x32x32xbf16>
    %92 = vector.shape_cast %91 : vector<1x32x32xbf16> to vector<32x32xbf16>
    %cst_42 = arith.constant dense<0.000000e+00> : vector<8x32xf32>
    %93 = tpu.matmul %90, %92, %cst_42 {dimension_numbers = #tpu.dot_dimension_numbers<[1], [0], [0], [1], [0, 0, 1, 1], [], []>} : vector<8x32xbf16>, vector<32x32xbf16>, vector<8x32xf32> -> vector<8x32xf32>
    %94 = vector.broadcast %16 : vector<1x32xf32> to vector<8x32xf32>
    %95 = arith.addf %93, %94 : vector<8x32xf32>
    %96 = arith.truncf %2 : vector<12x32xf32> to vector<12x32xbf16>
    %cst_43 = arith.constant dense<0.000000e+00> : vector<12x64xf32>
    %97 = tpu.matmul %96, %10, %cst_43 {dimension_numbers = #tpu.dot_dimension_numbers<[1], [0], [0], [1], [0, 0, 1, 1], [], []>} : vector<12x32xbf16>, vector<32x64xbf16>, vector<12x64xf32> -> vector<12x64xf32>
    %98 = vector.broadcast %11 : vector<1x64xf32> to vector<12x64xf32>
    %99 = arith.addf %97, %98 : vector<12x64xf32>
    %100 = vector.extract_strided_slice %99 {offsets = [0, 0], sizes = [12, 32], strides = [1, 1]} : vector<12x64xf32> to vector<12x32xf32>
    %101 = vector.extract_strided_slice %99 {offsets = [0, 32], sizes = [12, 32], strides = [1, 1]} : vector<12x64xf32> to vector<12x32xf32>
    %102 = vector.extract_strided_slice %9 {offsets = [2, 0, 0], sizes = [1, 32, 32], strides = [1, 1, 1]} : vector<3x32x32xbf16> to vector<1x32x32xbf16>
    %103 = vector.shape_cast %102 : vector<1x32x32xbf16> to vector<32x32xbf16>
    %104 = arith.truncf %95 : vector<8x32xf32> to vector<8x32xbf16>
    %105 = vector.shape_cast %104 : vector<8x32xbf16> to vector<1x8x32xbf16>
    %106 = vector.shape_cast %100 : vector<12x32xf32> to vector<1x12x32xf32>
    %107 = vector.shape_cast %101 : vector<12x32xf32> to vector<1x12x32xf32>
    %108 = vector.shape_cast %6 : vector<48x32xf32> to vector<1x48x32xf32>
    %109 = tpu.concatenate %106, %106, %106, %106 in 1 : vector<1x12x32xf32>, vector<1x12x32xf32>, vector<1x12x32xf32>, vector<1x12x32xf32> -> vector<1x48x32xf32>
    %110 = arith.mulf %109, %108 : vector<1x48x32xf32>
    %111 = arith.truncf %110 : vector<1x48x32xf32> to vector<1x48x32xbf16>
    %112 = tpu.concatenate %107, %107, %107, %107 in 1 : vector<1x12x32xf32>, vector<1x12x32xf32>, vector<1x12x32xf32>, vector<1x12x32xf32> -> vector<1x48x32xf32>
    %113 = arith.mulf %112, %108 : vector<1x48x32xf32>
    %114 = tpu.concatenate %113, %108 in 2 : vector<1x48x32xf32>, vector<1x48x32xf32> -> vector<1x48x64xf32>
    %115 = arith.truncf %114 : vector<1x48x64xf32> to vector<1x48x64xbf16>
    "tpu.trace_start"() <{level = 10 : i32, message = "bqh,bkh->bqk"}> : () -> ()
    %cst_44 = arith.constant dense<0.000000e+00> : vector<1x8x48xf32>
    %116 = tpu.matmul %105, %111, %cst_44 {dimension_numbers = #tpu.dot_dimension_numbers<[2], [2], [1], [1], [0, 0, 0, 1, 1, 1], [0], [0]>} : vector<1x8x32xbf16>, vector<1x48x32xbf16>, vector<1x8x48xf32> -> vector<1x8x48xf32>
    "tpu.trace_stop"() : () -> ()
    %117 = vector.broadcast %4 : vector<1x1x48xf32> to vector<1x8x48xf32>
    %118 = arith.addf %116, %117 : vector<1x8x48xf32>
    %cst_45 = arith.constant dense<0xFF800000> : vector<1x8xf32>
    %119 = vector.multi_reduction <maximumf>, %118, %cst_45 [2] : vector<1x8x48xf32> to vector<1x8xf32>
    %120 = vector.shape_cast %119 : vector<1x8xf32> to vector<1x8x1xf32>
    %121 = vector.broadcast %120 : vector<1x8x1xf32> to vector<1x8x48xf32>
    %122 = arith.subf %118, %121 : vector<1x8x48xf32>
    %123 = math.exp %122 : vector<1x8x48xf32>
    %124 = arith.truncf %123 : vector<1x8x48xf32> to vector<1x8x48xbf16>
    "tpu.trace_start"() <{level = 10 : i32, message = "bqk,bkh->bqh"}> : () -> ()
    %cst_46 = arith.constant dense<0.000000e+00> : vector<1x8x64xf32>
    %125 = tpu.matmul %124, %115, %cst_46 {dimension_numbers = #tpu.dot_dimension_numbers<[2], [1], [1], [2], [0, 0, 0, 1, 1, 2], [0], [0]>} : vector<1x8x48xbf16>, vector<1x48x64xbf16>, vector<1x8x64xf32> -> vector<1x8x64xf32>
    "tpu.trace_stop"() : () -> ()
    %126 = vector.shape_cast %125 : vector<1x8x64xf32> to vector<8x64xf32>
    %127 = vector.extract_strided_slice %126 {offsets = [0, 0], sizes = [8, 32], strides = [1, 1]} : vector<8x64xf32> to vector<8x32xf32>
    %128 = vector.extract_strided_slice %126 {offsets = [0, 32], sizes = [8, 32], strides = [1, 1]} : vector<8x64xf32> to vector<8x32xf32>
    %129 = tpu.reciprocal %128 {approx = true} : vector<8x32xf32> -> vector<8x32xf32>
    %130 = arith.mulf %127, %129 : vector<8x32xf32>
    %131 = arith.truncf %130 : vector<8x32xf32> to vector<8x32xbf16>
    %cst_47 = arith.constant dense<0.000000e+00> : vector<8x32xf32>
    %132 = tpu.matmul %131, %103, %cst_47 {dimension_numbers = #tpu.dot_dimension_numbers<[1], [0], [0], [1], [0, 0, 1, 1], [], []>} : vector<8x32xbf16>, vector<32x32xbf16>, vector<8x32xf32> -> vector<8x32xf32>
    %133 = vector.broadcast %18 : vector<1x32xf32> to vector<8x32xf32>
    %134 = arith.addf %132, %133 : vector<8x32xf32>
    %135 = arith.addf %89, %134 : vector<8x32xf32>
    %cst_48 = arith.constant dense<0.000000e+00> : vector<8xf32>
    %136 = vector.multi_reduction <add>, %135, %cst_48 [1] : vector<8x32xf32> to vector<8xf32>
    %137 = vector.shape_cast %136 : vector<8xf32> to vector<8x1xf32>
    %cst_49 = arith.constant 3.200000e+01 : f32
    %138 = vector.broadcast %cst_49 : f32 to vector<8x1xf32>
    %139 = arith.divf %137, %138 : vector<8x1xf32>
    %140 = vector.broadcast %139 : vector<8x1xf32> to vector<8x32xf32>
    %141 = arith.subf %135, %140 : vector<8x32xf32>
    %142 = arith.mulf %141, %141 : vector<8x32xf32>
    %cst_50 = arith.constant dense<0.000000e+00> : vector<8xf32>
    %143 = vector.multi_reduction <add>, %142, %cst_50 [1] : vector<8x32xf32> to vector<8xf32>
    %144 = vector.shape_cast %143 : vector<8xf32> to vector<8x1xf32>
    %cst_51 = arith.constant 3.100000e+01 : f32
    %145 = vector.broadcast %cst_51 : f32 to vector<8x1xf32>
    %146 = arith.divf %144, %145 : vector<8x1xf32>
    %147 = math.sqrt %146 : vector<8x1xf32>
    %cst_52 = arith.constant 9.99999997E-7 : f32
    %148 = vector.broadcast %cst_52 : f32 to vector<8x1xf32>
    %149 = arith.addf %147, %148 : vector<8x1xf32>
    %150 = tpu.reciprocal %149 {approx = true} : vector<8x1xf32> -> vector<8x1xf32>
    %151 = vector.broadcast %139 : vector<8x1xf32> to vector<8x32xf32>
    %152 = arith.subf %135, %151 : vector<8x32xf32>
    %153 = vector.broadcast %22 : vector<1x32xf32> to vector<8x32xf32>
    %154 = arith.mulf %153, %152 : vector<8x32xf32>
    %155 = vector.broadcast %150 : vector<8x1xf32> to vector<8x32xf32>
    %156 = arith.mulf %154, %155 : vector<8x32xf32>
    %157 = vector.broadcast %23 : vector<1x32xf32> to vector<8x32xf32>
    %158 = arith.addf %156, %157 : vector<8x32xf32>
    %159 = arith.truncf %158 : vector<8x32xf32> to vector<8x32xbf16>
    %cst_53 = arith.constant dense<0.000000e+00> : vector<8x128xf32>
    %160 = tpu.matmul %159, %12, %cst_53 {dimension_numbers = #tpu.dot_dimension_numbers<[1], [0], [0], [1], [0, 0, 1, 1], [], []>} : vector<8x32xbf16>, vector<32x128xbf16>, vector<8x128xf32> -> vector<8x128xf32>
    %161 = vector.broadcast %13 : vector<1x128xf32> to vector<8x128xf32>
    %162 = arith.addf %160, %161 : vector<8x128xf32>
    %cst_54 = arith.constant 0.000000e+00 : f32
    %163 = vector.broadcast %cst_54 : f32 to vector<8x128xf32>
    %164 = arith.maximumf %162, %163 : vector<8x128xf32>
    %165 = arith.truncf %164 : vector<8x128xf32> to vector<8x128xbf16>
    %cst_55 = arith.constant dense<0.000000e+00> : vector<8x32xf32>
    %166 = tpu.matmul %165, %14, %cst_55 {dimension_numbers = #tpu.dot_dimension_numbers<[1], [0], [0], [1], [0, 0, 1, 1], [], []>} : vector<8x128xbf16>, vector<128x32xbf16>, vector<8x32xf32> -> vector<8x32xf32>
    %167 = vector.broadcast %19 : vector<1x32xf32> to vector<8x32xf32>
    %168 = arith.addf %166, %167 : vector<8x32xf32>
    %169 = arith.addf %158, %168 : vector<8x32xf32>
    %cst_56 = arith.constant dense<0.000000e+00> : vector<8xf32>
    %170 = vector.multi_reduction <add>, %169, %cst_56 [1] : vector<8x32xf32> to vector<8xf32>
    %171 = vector.shape_cast %170 : vector<8xf32> to vector<8x1xf32>
    %cst_57 = arith.constant 3.200000e+01 : f32
    %172 = vector.broadcast %cst_57 : f32 to vector<8x1xf32>
    %173 = arith.divf %171, %172 : vector<8x1xf32>
    %174 = vector.broadcast %173 : vector<8x1xf32> to vector<8x32xf32>
    %175 = arith.subf %169, %174 : vector<8x32xf32>
    %176 = arith.mulf %175, %175 : vector<8x32xf32>
    %cst_58 = arith.constant dense<0.000000e+00> : vector<8xf32>
    %177 = vector.multi_reduction <add>, %176, %cst_58 [1] : vector<8x32xf32> to vector<8xf32>
    %178 = vector.shape_cast %177 : vector<8xf32> to vector<8x1xf32>
    %cst_59 = arith.constant 3.100000e+01 : f32
    %179 = vector.broadcast %cst_59 : f32 to vector<8x1xf32>
    %180 = arith.divf %178, %179 : vector<8x1xf32>
    %181 = math.sqrt %180 : vector<8x1xf32>
    %cst_60 = arith.constant 9.99999997E-7 : f32
    %182 = vector.broadcast %cst_60 : f32 to vector<8x1xf32>
    %183 = arith.addf %181, %182 : vector<8x1xf32>
    %184 = tpu.reciprocal %183 {approx = true} : vector<8x1xf32> -> vector<8x1xf32>
    %185 = vector.broadcast %173 : vector<8x1xf32> to vector<8x32xf32>
    %186 = arith.subf %169, %185 : vector<8x32xf32>
    %187 = vector.broadcast %24 : vector<1x32xf32> to vector<8x32xf32>
    %188 = arith.mulf %187, %186 : vector<8x32xf32>
    %189 = vector.broadcast %184 : vector<8x1xf32> to vector<8x32xf32>
    %190 = arith.mulf %188, %189 : vector<8x32xf32>
    %191 = vector.broadcast %25 : vector<1x32xf32> to vector<8x32xf32>
    %192 = arith.addf %190, %191 : vector<8x32xf32>
    %c0_61 = arith.constant 0 : index
    %c0_62 = arith.constant 0 : index
    %193 = vector.load %arg16[%c0_61, %c0_62] : memref<8x32xf32, #tpu.memory_space<vmem>>, vector<8x32xf32>
    tpu.vector_store %arg16[%c0_61, %c0_62], %192 {strides = array<i32>} : memref<8x32xf32, #tpu.memory_space<vmem>>, vector<8x32xf32>,
    return
  }
  func.func @transform_0(%arg0: i32) -> (i32, i32) {
    %c0_i32 = arith.constant 0 : i32
    %c0_i32_0 = arith.constant 0 : i32
    return %arg0, %c0_i32 : i32, i32
  }
  func.func @transform_1(%arg0: i32) -> (i32, i32, i32) {
    %c0_i32 = arith.constant 0 : i32
    %c0_i32_0 = arith.constant 0 : i32
    %c0_i32_1 = arith.constant 0 : i32
    return %arg0, %c0_i32, %c0_i32_0 : i32, i32, i32
  }
  func.func @transform_2(%arg0: i32) -> (i32, i32, i32) {
    %c0_i32 = arith.constant 0 : i32
    %c0_i32_0 = arith.constant 0 : i32
    %c0_i32_1 = arith.constant 0 : i32
    return %arg0, %c0_i32, %c0_i32_0 : i32, i32, i32
  }
  func.func @transform_3(%arg0: i32) -> (i32, i32, i32) {
    %c0_i32 = arith.constant 0 : i32
    %c0_i32_0 = arith.constant 0 : i32
    %c0_i32_1 = arith.constant 0 : i32
    return %arg0, %c0_i32, %c0_i32_0 : i32, i32, i32
  }
  func.func @transform_4(%arg0: i32) -> (i32, i32) {
    %c0_i32 = arith.constant 0 : i32
    %c0_i32_0 = arith.constant 0 : i32
    %c0_i32_1 = arith.constant 0 : i32
    return %c0_i32, %c0_i32_0 : i32, i32
  }
  func.func @transform_5(%arg0: i32) -> (i32, i32) {
    %c0_i32 = arith.constant 0 : i32
    %c0_i32_0 = arith.constant 0 : i32
    %c0_i32_1 = arith.constant 0 : i32
    return %c0_i32, %c0_i32_0 : i32, i32
  }
  func.func @transform_6(%arg0: i32) -> (i32, i32) {
    %c0_i32 = arith.constant 0 : i32
    %c0_i32_0 = arith.constant 0 : i32
    %c0_i32_1 = arith.constant 0 : i32
    return %c0_i32, %c0_i32_0 : i32, i32
  }
  func.func @transform_7(%arg0: i32) -> (i32, i32) {
    %c0_i32 = arith.constant 0 : i32
    %c0_i32_0 = arith.constant 0 : i32
    %c0_i32_1 = arith.constant 0 : i32
    return %c0_i32, %c0_i32_0 : i32, i32
  }
  func.func @transform_8(%arg0: i32) -> (i32, i32, i32) {
    %c0_i32 = arith.constant 0 : i32
    %c0_i32_0 = arith.constant 0 : i32
    %c0_i32_1 = arith.constant 0 : i32
    %c0_i32_2 = arith.constant 0 : i32
    return %c0_i32, %c0_i32_0, %c0_i32_1 : i32, i32, i32
  }
  func.func @transform_9(%arg0: i32) -> (i32, i32) {
    %c0_i32 = arith.constant 0 : i32
    %c0_i32_0 = arith.constant 0 : i32
    %c0_i32_1 = arith.constant 0 : i32
    return %c0_i32, %c0_i32_0 : i32, i32
  }
  func.func @transform_10(%arg0: i32) -> (i32, i32) {
    %c0_i32 = arith.constant 0 : i32
    %c0_i32_0 = arith.constant 0 : i32
    %c0_i32_1 = arith.constant 0 : i32
    return %c0_i32, %c0_i32_0 : i32, i32
  }
  func.func @transform_11(%arg0: i32) -> (i32, i32) {
    %c0_i32 = arith.constant 0 : i32
    %c0_i32_0 = arith.constant 0 : i32
    %c0_i32_1 = arith.constant 0 : i32
    return %c0_i32, %c0_i32_0 : i32, i32
  }
  func.func @transform_12(%arg0: i32) -> (i32, i32) {
    %c0_i32 = arith.constant 0 : i32
    %c0_i32_0 = arith.constant 0 : i32
    %c0_i32_1 = arith.constant 0 : i32
    return %c0_i32, %c0_i32_0 : i32, i32
  }
  func.func @transform_13(%arg0: i32) -> (i32, i32) {
    %c0_i32 = arith.constant 0 : i32
    %c0_i32_0 = arith.constant 0 : i32
    %c0_i32_1 = arith.constant 0 : i32
    return %c0_i32, %c0_i32_0 : i32, i32
  }
  func.func @transform_14(%arg0: i32) -> (i32, i32) {
    %c0_i32 = arith.constant 0 : i32
    %c0_i32_0 = arith.constant 0 : i32
    %c0_i32_1 = arith.constant 0 : i32
    return %c0_i32, %c0_i32_0 : i32, i32
  }
  func.func @transform_15(%arg0: i32) -> (i32, i32) {
    %c0_i32 = arith.constant 0 : i32
    %c0_i32_0 = arith.constant 0 : i32
    return %arg0, %c0_i32 : i32, i32
  }
}

</mosaic_0001>

<llo_original>
// kernel: tpu_custom_call.1
$region0: #{tpu_custom_call.1}
  #allocation0 [shape = 'u32[]', space=smem, size = 0x4, offset = 0x4, fixed_abs, tag = 'smem constant byte address 0x4 - core index']
  #allocation1 [shape = 'u32[144,128]{1,0:T(1,128)}', space=vmem, size = 0x12000, scoped, tag = 'internal scratch']
  %s0 = inlined_call_operand.vmem [shape: f32[16,32], index: 0, kind: input, shape index: {}]
  %s1 = inlined_call_operand.vmem [shape: f32[2,12,32], index: 1, kind: input, shape index: {}]
  %s2 = inlined_call_operand.vmem [shape: f32[2,1,32], index: 2, kind: input, shape index: {}]
  %s3 = inlined_call_operand.vmem [shape: f32[2,1,48], index: 3, kind: input, shape index: {}]
  %s4 = inlined_call_operand.vmem [shape: f32[32,32], index: 4, kind: input, shape index: {}]
  %s5 = inlined_call_operand.vmem [shape: f32[48,32], index: 5, kind: input, shape index: {}]
  %s6 = inlined_call_operand.vmem [shape: bf16[32,96], index: 6, kind: input, shape index: {}]
  %s7 = inlined_call_operand.vmem [shape: f32[1,96], index: 7, kind: input, shape index: {}]
  %s8 = inlined_call_operand.vmem [shape: bf16[3,32,32], index: 8, kind: input, shape index: {}]
  %s9 = inlined_call_operand.vmem [shape: bf16[32,64], index: 9, kind: input, shape index: {}]
  %s10 = inlined_call_operand.vmem [shape: f32[1,64], index: 10, kind: input, shape index: {}]
  %s11 = inlined_call_operand.vmem [shape: bf16[32,128], index: 11, kind: input, shape index: {}]
  %s12 = inlined_call_operand.vmem [shape: f32[1,128], index: 12, kind: input, shape index: {}]
  %s13 = inlined_call_operand.vmem [shape: bf16[128,32], index: 13, kind: input, shape index: {}]
  %s14 = inlined_call_operand.vmem [shape: f32[10,32], index: 14, kind: input, shape index: {}]
  %s15 = inlined_call_operand.hbm [shape: f32[16,32], index: 15, kind: output, shape index: {}]
  %s16 = sld [smem:[#allocation0]]
  $region93: #{tpu_custom_call.1} parent=0
    _
  %s18 = ssub.s32 1, %s16
  %s19 = scalar_select 0, %s18, %s16
  $region1: #{tpu_custom_call.1} parent=0
    #allocation2 [shape = 'u8[8192]{0}', space=vmem, size = 0x2000, scoped, tag = 'output window, operand 0']
    #allocation3 [shape = 's32[2]{0}', space=sflag, size = 0x8, scoped, tag = 'scoped memory for tpu_custom_call.1']
    %20 = vsyncpa [#allocation3], 0
    %s21 = scalar_lea.sflag [#allocation3], 1
    %22 = vsyncpa %s21, 0
    loop: start=0, step=1, limit=4
    $region2: #{tpu_custom_call.1} parent=1 // loop_pre_header
      _
    $region3: #{tpu_custom_call.1} parent=1 // loop_header
      %s24 = sphi 0, %s28
      %p25 = scmp.ge.s32.totalorder %s24, 4
      %s34 = sphi 0, %s36
      %s37 = sphi 0, %s34
      %s38 = sphi 0, %s37
      %s54 = sphi 0, %s38
      %s60 = sphi 0, %s62
      %s63 = sphi 0, %s60
      %s64 = sphi 0, %s63
      %s80 = sphi 0, %s64
      %s86 = sphi 0, %s88
      %s89 = sphi 0, %s86
      %s90 = sphi 0, %s89
      %s106 = sphi 0, %s90
      %s112 = sphi 0, %s114
      %s115 = sphi 0, %s112
      %s116 = sphi 0, %s115
      %s132 = sphi 0, %s116
      %s136 = sphi 0, %s136
      %s138 = sphi 0, %s136
      %s139 = sphi 0, %s138
      %s153 = sphi 0, %s139
      %s157 = sphi 0, %s157
      %s159 = sphi 0, %s157
      %s160 = sphi 0, %s159
      %s174 = sphi 0, %s160
      %s178 = sphi 0, %s178
      %s180 = sphi 0, %s178
      %s181 = sphi 0, %s180
      %s195 = sphi 0, %s181
      %s199 = sphi 0, %s199
      %s201 = sphi 0, %s199
      %s202 = sphi 0, %s201
      %s216 = sphi 0, %s202
      %s220 = sphi 0, %s220
      %s222 = sphi 0, %s220
      %s223 = sphi 0, %s222
      %s237 = sphi 0, %s223
      %s241 = sphi 0, %s241
      %s243 = sphi 0, %s241
      %s244 = sphi 0, %s243
      %s258 = sphi 0, %s244
      %s262 = sphi 0, %s262
      %s264 = sphi 0, %s262
      %s265 = sphi 0, %s264
      %s279 = sphi 0, %s265
      %s283 = sphi 0, %s283
      %s285 = sphi 0, %s283
      %s286 = sphi 0, %s285
      %s300 = sphi 0, %s286
      %s304 = sphi 0, %s304
      %s306 = sphi 0, %s304
      %s307 = sphi 0, %s306
      %s321 = sphi 0, %s307
      %s325 = sphi 0, %s325
      %s327 = sphi 0, %s325
      %s328 = sphi 0, %s327
      %s342 = sphi 0, %s328
      %s346 = sphi 0, %s346
      %s348 = sphi 0, %s346
      %s349 = sphi 0, %s348
      %s363 = sphi 0, %s349
      %s369 = sphi 0, %s371
      %s372 = sphi 0, %s369
      %s373 = sphi 0, %s372
      %s389 = sphi 0, %s373
    $region4: #{tpu_custom_call.1} parent=1 // loop_header_branch
      %27 = sbr.rel (%p25) target = $region8
    $region5: #{tpu_custom_call.1} parent=1 // loop_body
      %s29 = ssub.s32 %s24, 1
      %s30 = ssub.s32 %s24, 2
      %s31 = sadd.s32 %s24, 1
      %s32 = ssub.s32 %s24, %s31
      %p33 = scmp.eq.s32.totalorder %s32, 0
      %s35 = sadd.s32 %s34, 1
      %s36 = scalar_select %p33, %s34, %s35
      %p39 = pneg %p33
      %p40 = scmp.eq.s32.totalorder %s24, 1
      %p41 = por %p39, %p40
      %p42 = scmp.ne.s32.totalorder %s34, %s37
      %p43 = scmp.eq.s32.totalorder %s24, 0
      %p44 = por %p42, %p43
      %p45 = scmp.ne.s32.totalorder %s34, %s37
      %p46 = scmp.eq.s32.totalorder %s29, 1
      %p47 = por %p45, %p46
      %p48 = scmp.ne.s32.totalorder %s37, %s38
      %p49 = scmp.eq.s32.totalorder %s29, 0
      %p50 = por %p48, %p49
      %p51 = scmp.ne.s32.totalorder %s37, %s38
      %p52 = scmp.eq.s32.totalorder %s30, 1
      %p53 = por %p51, %p52
      %p55 = scmp.ne.s32.totalorder %s38, %s54
      %p56 = scmp.eq.s32.totalorder %s30, 0
      %p57 = por %p55, %p56
      %s58 = ssub.s32 %s24, %s31
      %p59 = scmp.eq.s32.totalorder %s58, 0
      %s61 = sadd.s32 %s60, 1
      %s62 = scalar_select %p59, %s60, %s61
      %p65 = pneg %p59
      %p66 = scmp.eq.s32.totalorder %s24, 1
      %p67 = por %p65, %p66
      %p68 = scmp.ne.s32.totalorder %s60, %s63
      %p69 = scmp.eq.s32.totalorder %s24, 0
      %p70 = por %p68, %p69
      %p71 = scmp.ne.s32.totalorder %s60, %s63
      %p72 = scmp.eq.s32.totalorder %s29, 1
      %p73 = por %p71, %p72
      %p74 = scmp.ne.s32.totalorder %s63, %s64
      %p75 = scmp.eq.s32.totalorder %s29, 0
      %p76 = por %p74, %p75
      %p77 = scmp.ne.s32.totalorder %s63, %s64
      %p78 = scmp.eq.s32.totalorder %s30, 1
      %p79 = por %p77, %p78
      %p81 = scmp.ne.s32.totalorder %s64, %s80
      %p82 = scmp.eq.s32.totalorder %s30, 0
      %p83 = por %p81, %p82
      %s84 = ssub.s32 %s24, %s31
      %p85 = scmp.eq.s32.totalorder %s84, 0
      %s87 = sadd.s32 %s86, 1
      %s88 = scalar_select %p85, %s86, %s87
      %p91 = pneg %p85
      %p92 = scmp.eq.s32.totalorder %s24, 1
      %p93 = por %p91, %p92
      %p94 = scmp.ne.s32.totalorder %s86, %s89
      %p95 = scmp.eq.s32.totalorder %s24, 0
      %p96 = por %p94, %p95
      %p97 = scmp.ne.s32.totalorder %s86, %s89
      %p98 = scmp.eq.s32.totalorder %s29, 1
      %p99 = por %p97, %p98
      %p100 = scmp.ne.s32.totalorder %s89, %s90
      %p101 = scmp.eq.s32.totalorder %s29, 0
      %p102 = por %p100, %p101
      %p103 = scmp.ne.s32.totalorder %s89, %s90
      %p104 = scmp.eq.s32.totalorder %s30, 1
      %p105 = por %p103, %p104
      %p107 = scmp.ne.s32.totalorder %s90, %s106
      %p108 = scmp.eq.s32.totalorder %s30, 0
      %p109 = por %p107, %p108
      %s110 = ssub.s32 %s24, %s31
      %p111 = scmp.eq.s32.totalorder %s110, 0
      %s113 = sadd.s32 %s112, 1
      %s114 = scalar_select %p111, %s112, %s113
      %p117 = pneg %p111
      %p118 = scmp.eq.s32.totalorder %s24, 1
      %p119 = por %p117, %p118
      %p120 = scmp.ne.s32.totalorder %s112, %s115
      %p121 = scmp.eq.s32.totalorder %s24, 0
      %p122 = por %p120, %p121
      %p123 = scmp.ne.s32.totalorder %s112, %s115
      %p124 = scmp.eq.s32.totalorder %s29, 1
      %p125 = por %p123, %p124
      %p126 = scmp.ne.s32.totalorder %s115, %s116
      %p127 = scmp.eq.s32.totalorder %s29, 0
      %p128 = por %p126, %p127
      %p129 = scmp.ne.s32.totalorder %s115, %s116
      %p130 = scmp.eq.s32.totalorder %s30, 1
      %p131 = por %p129, %p130
      %p133 = scmp.ne.s32.totalorder %s116, %s132
      %p134 = scmp.eq.s32.totalorder %s30, 0
      %p135 = por %p133, %p134
      %s137 = sadd.s32 %s136, 1
      %p140 = scmp.eq.s32.totalorder %s24, 1
      %p141 = scmp.ne.s32.totalorder %s136, %s138
      %p142 = scmp.eq.s32.totalorder %s24, 0
      %p143 = por %p141, %p142
      %p144 = scmp.ne.s32.totalorder %s136, %s138
      %p145 = scmp.eq.s32.totalorder %s29, 1
      %p146 = por %p144, %p145
      %p147 = scmp.ne.s32.totalorder %s138, %s139
      %p148 = scmp.eq.s32.totalorder %s29, 0
      %p149 = por %p147, %p148
      %p150 = scmp.ne.s32.totalorder %s138, %s139
      %p151 = scmp.eq.s32.totalorder %s30, 1
      %p152 = por %p150, %p151
      %p154 = scmp.ne.s32.totalorder %s139, %s153
      %p155 = scmp.eq.s32.totalorder %s30, 0
      %p156 = por %p154, %p155
      %s158 = sadd.s32 %s157, 1
      %p161 = scmp.eq.s32.totalorder %s24, 1
      %p162 = scmp.ne.s32.totalorder %s157, %s159
      %p163 = scmp.eq.s32.totalorder %s24, 0
      %p164 = por %p162, %p163
      %p165 = scmp.ne.s32.totalorder %s157, %s159
      %p166 = scmp.eq.s32.totalorder %s29, 1
      %p167 = por %p165, %p166
      %p168 = scmp.ne.s32.totalorder %s159, %s160
      %p169 = scmp.eq.s32.totalorder %s29, 0
      %p170 = por %p168, %p169
      %p171 = scmp.ne.s32.totalorder %s159, %s160
      %p172 = scmp.eq.s32.totalorder %s30, 1
      %p173 = por %p171, %p172
      %p175 = scmp.ne.s32.totalorder %s160, %s174
      %p176 = scmp.eq.s32.totalorder %s30, 0
      %p177 = por %p175, %p176
      %s179 = sadd.s32 %s178, 1
      %p182 = scmp.eq.s32.totalorder %s24, 1
      %p183 = scmp.ne.s32.totalorder %s178, %s180
      %p184 = scmp.eq.s32.totalorder %s24, 0
      %p185 = por %p183, %p184
      %p186 = scmp.ne.s32.totalorder %s178, %s180
      %p187 = scmp.eq.s32.totalorder %s29, 1
      %p188 = por %p186, %p187
      %p189 = scmp.ne.s32.totalorder %s180, %s181
      %p190 = scmp.eq.s32.totalorder %s29, 0
      %p191 = por %p189, %p190
      %p192 = scmp.ne.s32.totalorder %s180, %s181
      %p193 = scmp.eq.s32.totalorder %s30, 1
      %p194 = por %p192, %p193
      %p196 = scmp.ne.s32.totalorder %s181, %s195
      %p197 = scmp.eq.s32.totalorder %s30, 0
      %p198 = por %p196, %p197
      %s200 = sadd.s32 %s199, 1
      %p203 = scmp.eq.s32.totalorder %s24, 1
      %p204 = scmp.ne.s32.totalorder %s199, %s201
      %p205 = scmp.eq.s32.totalorder %s24, 0
      %p206 = por %p204, %p205
      %p207 = scmp.ne.s32.totalorder %s199, %s201
      %p208 = scmp.eq.s32.totalorder %s29, 1
      %p209 = por %p207, %p208
      %p210 = scmp.ne.s32.totalorder %s201, %s202
      %p211 = scmp.eq.s32.totalorder %s29, 0
      %p212 = por %p210, %p211
      %p213 = scmp.ne.s32.totalorder %s201, %s202
      %p214 = scmp.eq.s32.totalorder %s30, 1
      %p215 = por %p213, %p214
      %p217 = scmp.ne.s32.totalorder %s202, %s216
      %p218 = scmp.eq.s32.totalorder %s30, 0
      %p219 = por %p217, %p218
      %s221 = sadd.s32 %s220, 1
      %p224 = scmp.eq.s32.totalorder %s24, 1
      %p225 = scmp.ne.s32.totalorder %s220, %s222
      %p226 = scmp.eq.s32.totalorder %s24, 0
      %p227 = por %p225, %p226
      %p228 = scmp.ne.s32.totalorder %s220, %s222
      %p229 = scmp.eq.s32.totalorder %s29, 1
      %p230 = por %p228, %p229
      %p231 = scmp.ne.s32.totalorder %s222, %s223
      %p232 = scmp.eq.s32.totalorder %s29, 0
      %p233 = por %p231, %p232
      %p234 = scmp.ne.s32.totalorder %s222, %s223
      %p235 = scmp.eq.s32.totalorder %s30, 1
      %p236 = por %p234, %p235
      %p238 = scmp.ne.s32.totalorder %s223, %s237
      %p239 = scmp.eq.s32.totalorder %s30, 0
      %p240 = por %p238, %p239
      %s242 = sadd.s32 %s241, 1
      %p245 = scmp.eq.s32.totalorder %s24, 1
      %p246 = scmp.ne.s32.totalorder %s241, %s243
      %p247 = scmp.eq.s32.totalorder %s24, 0
      %p248 = por %p246, %p247
      %p249 = scmp.ne.s32.totalorder %s241, %s243
      %p250 = scmp.eq.s32.totalorder %s29, 1
      %p251 = por %p249, %p250
      %p252 = scmp.ne.s32.totalorder %s243, %s244
      %p253 = scmp.eq.s32.totalorder %s29, 0
      %p254 = por %p252, %p253
      %p255 = scmp.ne.s32.totalorder %s243, %s244
      %p256 = scmp.eq.s32.totalorder %s30, 1
      %p257 = por %p255, %p256
      %p259 = scmp.ne.s32.totalorder %s244, %s258
      %p260 = scmp.eq.s32.totalorder %s30, 0
      %p261 = por %p259, %p260
      %s263 = sadd.s32 %s262, 1
      %p266 = scmp.eq.s32.totalorder %s24, 1
      %p267 = scmp.ne.s32.totalorder %s262, %s264
      %p268 = scmp.eq.s32.totalorder %s24, 0
      %p269 = por %p267, %p268
      %p270 = scmp.ne.s32.totalorder %s262, %s264
      %p271 = scmp.eq.s32.totalorder %s29, 1
      %p272 = por %p270, %p271
      %p273 = scmp.ne.s32.totalorder %s264, %s265
      %p274 = scmp.eq.s32.totalorder %s29, 0
      %p275 = por %p273, %p274
      %p276 = scmp.ne.s32.totalorder %s264, %s265
      %p277 = scmp.eq.s32.totalorder %s30, 1
      %p278 = por %p276, %p277
      %p280 = scmp.ne.s32.totalorder %s265, %s279
      %p281 = scmp.eq.s32.totalorder %s30, 0
      %p282 = por %p280, %p281
      %s284 = sadd.s32 %s283, 1
      %p287 = scmp.eq.s32.totalorder %s24, 1
      %p288 = scmp.ne.s32.totalorder %s283, %s285
      %p289 = scmp.eq.s32.totalorder %s24, 0
      %p290 = por %p288, %p289
      %p291 = scmp.ne.s32.totalorder %s283, %s285
      %p292 = scmp.eq.s32.totalorder %s29, 1
      %p293 = por %p291, %p292
      %p294 = scmp.ne.s32.totalorder %s285, %s286
      %p295 = scmp.eq.s32.totalorder %s29, 0
      %p296 = por %p294, %p295
      %p297 = scmp.ne.s32.totalorder %s285, %s286
      %p298 = scmp.eq.s32.totalorder %s30, 1
      %p299 = por %p297, %p298
      %p301 = scmp.ne.s32.totalorder %s286, %s300
      %p302 = scmp.eq.s32.totalorder %s30, 0
      %p303 = por %p301, %p302
      %s305 = sadd.s32 %s304, 1
      %p308 = scmp.eq.s32.totalorder %s24, 1
      %p309 = scmp.ne.s32.totalorder %s304, %s306
      %p310 = scmp.eq.s32.totalorder %s24, 0
      %p311 = por %p309, %p310
      %p312 = scmp.ne.s32.totalorder %s304, %s306
      %p313 = scmp.eq.s32.totalorder %s29, 1
      %p314 = por %p312, %p313
      %p315 = scmp.ne.s32.totalorder %s306, %s307
      %p316 = scmp.eq.s32.totalorder %s29, 0
      %p317 = por %p315, %p316
      %p318 = scmp.ne.s32.totalorder %s306, %s307
      %p319 = scmp.eq.s32.totalorder %s30, 1
      %p320 = por %p318, %p319
      %p322 = scmp.ne.s32.totalorder %s307, %s321
      %p323 = scmp.eq.s32.totalorder %s30, 0
      %p324 = por %p322, %p323
      %s326 = sadd.s32 %s325, 1
      %p329 = scmp.eq.s32.totalorder %s24, 1
      %p330 = scmp.ne.s32.totalorder %s325, %s327
      %p331 = scmp.eq.s32.totalorder %s24, 0
      %p332 = por %p330, %p331
      %p333 = scmp.ne.s32.totalorder %s325, %s327
      %p334 = scmp.eq.s32.totalorder %s29, 1
      %p335 = por %p333, %p334
      %p336 = scmp.ne.s32.totalorder %s327, %s328
      %p337 = scmp.eq.s32.totalorder %s29, 0
      %p338 = por %p336, %p337
      %p339 = scmp.ne.s32.totalorder %s327, %s328
      %p340 = scmp.eq.s32.totalorder %s30, 1
      %p341 = por %p339, %p340
      %p343 = scmp.ne.s32.totalorder %s328, %s342
      %p344 = scmp.eq.s32.totalorder %s30, 0
      %p345 = por %p343, %p344
      %s347 = sadd.s32 %s346, 1
      %p350 = scmp.eq.s32.totalorder %s24, 1
      %p351 = scmp.ne.s32.totalorder %s346, %s348
      %p352 = scmp.eq.s32.totalorder %s24, 0
      %p353 = por %p351, %p352
      %p354 = scmp.ne.s32.totalorder %s346, %s348
      %p355 = scmp.eq.s32.totalorder %s29, 1
      %p356 = por %p354, %p355
      %p357 = scmp.ne.s32.totalorder %s348, %s349
      %p358 = scmp.eq.s32.totalorder %s29, 0
      %p359 = por %p357, %p358
      %p360 = scmp.ne.s32.totalorder %s348, %s349
      %p361 = scmp.eq.s32.totalorder %s30, 1
      %p362 = por %p360, %p361
      %p364 = scmp.ne.s32.totalorder %s349, %s363
      %p365 = scmp.eq.s32.totalorder %s30, 0
      %p366 = por %p364, %p365
      %s367 = ssub.s32 %s24, %s31
      %p368 = scmp.eq.s32.totalorder %s367, 0
      %s370 = sadd.s32 %s369, 1
      %s371 = scalar_select %p368, %s369, %s370
      %p374 = pneg %p368
      %p375 = scmp.eq.s32.totalorder %s24, 1
      %p376 = por %p374, %p375
      %p377 = scmp.ne.s32.totalorder %s369, %s372
      %p378 = scmp.eq.s32.totalorder %s24, 0
      %p379 = por %p377, %p378
      %p380 = scmp.ne.s32.totalorder %s369, %s372
      %p381 = scmp.eq.s32.totalorder %s29, 1
      %p382 = por %p380, %p381
      %p383 = scmp.ne.s32.totalorder %s372, %s373
      %p384 = scmp.eq.s32.totalorder %s29, 0
      %p385 = por %p383, %p384
      %p386 = scmp.ne.s32.totalorder %s372, %s373
      %p387 = scmp.eq.s32.totalorder %s30, 1
      %p388 = por %p386, %p387
      %p390 = scmp.ne.s32.totalorder %s373, %s389
      %p391 = scmp.eq.s32.totalorder %s30, 0
      %p392 = por %p390, %p391
      %p393 = scmp.le.s32.totalorder 1, %s24
      %p394 = scmp.lt.s32.totalorder %s24, 3
      %p395 = pnand %p393, %p394
      %p396 = pneg %p395
      // Predicated region
      $region9: #{tpu_custom_call.1} parent=5 // pred_check
        _
      $region10: #{tpu_custom_call.1} parent=5 // pred_check_branch
        %398 = sbr.rel (%p395) target = $region12
      $region11: #{tpu_custom_call.1} parent=5 // pred_region
        %s399 = ssub.s32 %s24, 1
        // Predicated region
        $region13: #{tpu_custom_call.1} parent=11 // pred_check
          %p400 = pneg %p149
        $region14: #{tpu_custom_call.1} parent=11 // pred_check_branch
          %402 = sbr.rel (%p400) target = $region16
        $region15: #{tpu_custom_call.1} parent=11 // pred_region
          _
        $region16: #{tpu_custom_call.1} parent=11 // pred_fallthru
          _
        // Predicated region
        $region17: #{tpu_custom_call.1} parent=11 // pred_check
          %p403 = pneg %p170
        $region18: #{tpu_custom_call.1} parent=11 // pred_check_branch
          %405 = sbr.rel (%p403) target = $region20
        $region19: #{tpu_custom_call.1} parent=11 // pred_region
          _
        $region20: #{tpu_custom_call.1} parent=11 // pred_fallthru
          _
        // Predicated region
        $region21: #{tpu_custom_call.1} parent=11 // pred_check
          %p406 = pneg %p191
        $region22: #{tpu_custom_call.1} parent=11 // pred_check_branch
          %408 = sbr.rel (%p406) target = $region24
        $region23: #{tpu_custom_call.1} parent=11 // pred_region
          _
        $region24: #{tpu_custom_call.1} parent=11 // pred_fallthru
          _
        // Predicated region
        $region25: #{tpu_custom_call.1} parent=11 // pred_check
          %p409 = pneg %p212
        $region26: #{tpu_custom_call.1} parent=11 // pred_check_branch
          %411 = sbr.rel (%p409) target = $region28
        $region27: #{tpu_custom_call.1} parent=11 // pred_region
          _
        $region28: #{tpu_custom_call.1} parent=11 // pred_fallthru
          _
        // Predicated region
        $region29: #{tpu_custom_call.1} parent=11 // pred_check
          %p412 = pneg %p233
        $region30: #{tpu_custom_call.1} parent=11 // pred_check_branch
          %414 = sbr.rel (%p412) target = $region32
        $region31: #{tpu_custom_call.1} parent=11 // pred_region
          _
        $region32: #{tpu_custom_call.1} parent=11 // pred_fallthru
          _
        // Predicated region
        $region33: #{tpu_custom_call.1} parent=11 // pred_check
          %p415 = pneg %p254
        $region34: #{tpu_custom_call.1} parent=11 // pred_check_branch
          %417 = sbr.rel (%p415) target = $region36
        $region35: #{tpu_custom_call.1} parent=11 // pred_region
          _
        $region36: #{tpu_custom_call.1} parent=11 // pred_fallthru
          _
        // Predicated region
        $region37: #{tpu_custom_call.1} parent=11 // pred_check
          %p418 = pneg %p275
        $region38: #{tpu_custom_call.1} parent=11 // pred_check_branch
          %420 = sbr.rel (%p418) target = $region40
        $region39: #{tpu_custom_call.1} parent=11 // pred_region
          _
        $region40: #{tpu_custom_call.1} parent=11 // pred_fallthru
          _
        // Predicated region
        $region41: #{tpu_custom_call.1} parent=11 // pred_check
          %p421 = pneg %p296
        $region42: #{tpu_custom_call.1} parent=11 // pred_check_branch
          %423 = sbr.rel (%p421) target = $region44
        $region43: #{tpu_custom_call.1} parent=11 // pred_region
          _
        $region44: #{tpu_custom_call.1} parent=11 // pred_fallthru
          _
        // Predicated region
        $region45: #{tpu_custom_call.1} parent=11 // pred_check
          %p424 = pneg %p317
        $region46: #{tpu_custom_call.1} parent=11 // pred_check_branch
          %426 = sbr.rel (%p424) target = $region48
        $region47: #{tpu_custom_call.1} parent=11 // pred_region
          _
        $region48: #{tpu_custom_call.1} parent=11 // pred_fallthru
          _
        // Predicated region
        $region49: #{tpu_custom_call.1} parent=11 // pred_check
          %p427 = pneg %p338
        $region50: #{tpu_custom_call.1} parent=11 // pred_check_branch
          %429 = sbr.rel (%p427) target = $region52
        $region51: #{tpu_custom_call.1} parent=11 // pred_region
          _
        $region52: #{tpu_custom_call.1} parent=11 // pred_fallthru
          _
        // Predicated region
        $region53: #{tpu_custom_call.1} parent=11 // pred_check
          %p430 = pneg %p359
        $region54: #{tpu_custom_call.1} parent=11 // pred_check_branch
          %432 = sbr.rel (%p430) target = $region56
        $region55: #{tpu_custom_call.1} parent=11 // pred_region
          _
        $region56: #{tpu_custom_call.1} parent=11 // pred_fallthru
          _
      $region12: #{tpu_custom_call.1} parent=5 // pred_fallthru
        _
      %p433 = scmp.lt.s32.totalorder %s24, 2
      // Predicated region
      $region57: #{tpu_custom_call.1} parent=5 // pred_check
        %p434 = pneg %p433
      $region58: #{tpu_custom_call.1} parent=5 // pred_check_branch
        %436 = sbr.rel (%p434) target = $region60
      $region59: #{tpu_custom_call.1} parent=5 // pred_region
        // Predicated region
        $region61: #{tpu_custom_call.1} parent=59 // pred_check
          %p437 = pneg %p44
        $region62: #{tpu_custom_call.1} parent=59 // pred_check_branch
          %439 = sbr.rel (%p437) target = $region64
        $region63: #{tpu_custom_call.1} parent=59 // pred_region
          %p440 = scmp.lt.s32.totalorder %s24, 1
          %s441 = scalar_select %p440, %s24, 1
          %s442 = smul.addr %s441, 8
          %s443 = scalar_lea.vmem %s0, %s442
        $region64: #{tpu_custom_call.1} parent=59 // pred_fallthru
          _
        // Predicated region
        $region65: #{tpu_custom_call.1} parent=59 // pred_check
          %p444 = pneg %p70
        $region66: #{tpu_custom_call.1} parent=59 // pred_check_branch
          %446 = sbr.rel (%p444) target = $region68
        $region67: #{tpu_custom_call.1} parent=59 // pred_region
          %p447 = scmp.lt.s32.totalorder %s24, 1
          %s448 = scalar_select %p447, %s24, 1
          %s449 = smul.addr %s448, 2
          %s450 = smul.addr %s449, 8
          %s451 = scalar_lea.vmem %s1, %s450
        $region68: #{tpu_custom_call.1} parent=59 // pred_fallthru
          _
        // Predicated region
        $region69: #{tpu_custom_call.1} parent=59 // pred_check
          %p452 = pneg %p96
        $region70: #{tpu_custom_call.1} parent=59 // pred_check_branch
          %454 = sbr.rel (%p452) target = $region72
        $region71: #{tpu_custom_call.1} parent=59 // pred_region
          %p455 = scmp.lt.s32.totalorder %s24, 1
          %s456 = scalar_select %p455, %s24, 1
          %s457 = scalar_lea.vmem %s2, %s456
        $region72: #{tpu_custom_call.1} parent=59 // pred_fallthru
          _
        // Predicated region
        $region73: #{tpu_custom_call.1} parent=59 // pred_check
          %p458 = pneg %p122
        $region74: #{tpu_custom_call.1} parent=59 // pred_check_branch
          %460 = sbr.rel (%p458) target = $region76
        $region75: #{tpu_custom_call.1} parent=59 // pred_region
          %p461 = scmp.lt.s32.totalorder %s24, 1
          %s462 = scalar_select %p461, %s24, 1
          %s463 = scalar_lea.vmem %s3, %s462
        $region76: #{tpu_custom_call.1} parent=59 // pred_fallthru
          _
      $region60: #{tpu_custom_call.1} parent=5 // pred_fallthru
        _
      %p464 = scmp.le.s32.totalorder 1, %s24
      %p465 = scmp.lt.s32.totalorder %s24, 3
      %p466 = pnand %p464, %p465
      %p467 = pneg %p466
      // Predicated region
      $region77: #{tpu_custom_call.1} parent=5 // pred_check
        _
      $region78: #{tpu_custom_call.1} parent=5 // pred_check_branch
        %469 = sbr.rel (%p466) target = $region80
      $region79: #{tpu_custom_call.1} parent=5 // pred_region
        %s470 = ssub.s32 %s24, 1
        %p471 = scmp.lt.s32.totalorder %s29, 1
        %s472 = scalar_select %p471, %s29, 1
        %s473 = smul.addr %s472, 8
        %s474 = scalar_lea.vmem %s0, %s473
        %p475 = pneg %p50
        %p476 = pneg %p47
        %p477 = scmp.lt.s32.totalorder %s29, 1
        %s478 = scalar_select %p477, %s29, 1
        %s479 = smul.addr %s478, 2
        %s480 = smul.addr %s479, 8
        %s481 = scalar_lea.vmem %s1, %s480
        %p482 = pneg %p76
        %p483 = pneg %p73
        %p484 = scmp.lt.s32.totalorder %s29, 1
        %s485 = scalar_select %p484, %s29, 1
        %s486 = scalar_lea.vmem %s2, %s485
        %p487 = pneg %p102
        %p488 = pneg %p99
        %p489 = scmp.lt.s32.totalorder %s29, 1
        %s490 = scalar_select %p489, %s29, 1
        %s491 = scalar_lea.vmem %s3, %s490
        %p492 = pneg %p128
        %p493 = pneg %p125
        %p494 = pneg %p149
        %p495 = pneg %p146
        %p496 = pneg %p170
        %p497 = pneg %p167
        %p498 = pneg %p191
        %p499 = pneg %p188
        %p500 = pneg %p212
        %p501 = pneg %p209
        %p502 = pneg %p233
        %p503 = pneg %p230
        %p504 = pneg %p254
        %p505 = pneg %p251
        %p506 = pneg %p275
        %p507 = pneg %p272
        %p508 = pneg %p296
        %p509 = pneg %p293
        %p510 = pneg %p317
        %p511 = pneg %p314
        %p512 = pneg %p338
        %p513 = pneg %p335
        %p514 = pneg %p359
        %p515 = pneg %p356
        %p516 = pneg %p385
        %p517 = pneg %p382
        %s518 = sand.u32 %s372, 1
        %s519 = scalar_lea.sflag [#allocation3], %s518
        %s520 = sand.u32 %s372, 1
        %s521 = smul.addr %s520, 8
        %s522 = scalar_lea.vmem [#allocation2], %s521
        %p523 = scmp.lt.s32.totalorder %s29, 1
        %s524 = scalar_select %p523, %s29, 1
        %s525 = smul.addr %s524, 8
        %s526 = scalar_lea.vmem %s0, %s525
        %p527 = scmp.lt.s32.totalorder %s29, 1
        %s528 = scalar_select %p527, %s29, 1
        %s529 = smul.addr %s528, 2
        %s530 = smul.addr %s529, 8
        %s531 = scalar_lea.vmem %s1, %s530
        %p532 = scmp.lt.s32.totalorder %s29, 1
        %s533 = scalar_select %p532, %s29, 1
        %s534 = scalar_lea.vmem %s2, %s533
        %p535 = scmp.lt.s32.totalorder %s29, 1
        %s536 = scalar_select %p535, %s29, 1
        %s537 = scalar_lea.vmem %s3, %s536
        %v539 = vld [vmem:[%s526] sm:$0xff]
        %v540 = vld [vmem:[%s531] sm:$0xff]
        %v541 = vld [vmem:[%s531 + $0x8] sm:$0xf]
        %v542 = vld [vmem:[%s534] sm:$0x1]
        %v543 = vld [vmem:[%s537] sm:$0x1]
        %v544 = vld [vmem:[%s4] sm:$0xff]
        %v545 = vld [vmem:[%s4 + $0x8] sm:$0xff]
        %v546 = vld [vmem:[%s4 + $0x10] sm:$0xff]
        %v547 = vld [vmem:[%s4 + $0x18] sm:$0xff]
        %v548 = vld [vmem:[%s5] sm:$0xff]
        %v549 = vld [vmem:[%s5 + $0x8] sm:$0xff]
        %v550 = vld [vmem:[%s5 + $0x10] sm:$0xff]
        %v551 = vld [vmem:[%s5 + $0x18] sm:$0xff]
        %v552 = vld [vmem:[%s5 + $0x20] sm:$0xff]
        %v553 = vld [vmem:[%s5 + $0x28] sm:$0xff]
        %v554 = vld [vmem:[%s6] sm:$0xf]
        %v555 = vld [vmem:[%s6 + $0x4] sm:$0xf]
        %v556 = vld [vmem:[%s6 + $0x8] sm:$0xf]
        %v557 = vld [vmem:[%s6 + $0xc] sm:$0xf]
        %v558 = vld [vmem:[%s7] sm:$0x1]
        %v559 = vld [vmem:[%s8] sm:$0xf]
        %v560 = vld [vmem:[%s8 + $0x4] sm:$0xf]
        %v561 = vld [vmem:[%s8 + $0x8] sm:$0xf]
        %v562 = vld [vmem:[%s8 + $0xc] sm:$0xf]
        %v563 = vld [vmem:[%s8 + $0x10] sm:$0xf]
        %v564 = vld [vmem:[%s8 + $0x14] sm:$0xf]
        %v565 = vld [vmem:[%s8 + $0x18] sm:$0xf]
        %v566 = vld [vmem:[%s8 + $0x1c] sm:$0xf]
        %v567 = vld [vmem:[%s8 + $0x20] sm:$0xf]
        %v568 = vld [vmem:[%s8 + $0x24] sm:$0xf]
        %v569 = vld [vmem:[%s8 + $0x28] sm:$0xf]
        %v570 = vld [vmem:[%s8 + $0x2c] sm:$0xf]
        %v571 = vld [vmem:[%s9] sm:$0xf]
        %v572 = vld [vmem:[%s9 + $0x4] sm:$0xf]
        %v573 = vld [vmem:[%s9 + $0x8] sm:$0xf]
        %v574 = vld [vmem:[%s9 + $0xc] sm:$0xf]
        %v575 = vld [vmem:[%s10] sm:$0x1]
        %v576 = vld [vmem:[%s11] sm:$0xf]
        %v577 = vld [vmem:[%s11 + $0x4] sm:$0xf]
        %v578 = vld [vmem:[%s11 + $0x8] sm:$0xf]
        %v579 = vld [vmem:[%s11 + $0xc] sm:$0xf]
        %v580 = vld [vmem:[%s12] sm:$0x1]
        %v581 = vld [vmem:[%s13] sm:$0xf]
        %v582 = vld [vmem:[%s13 + $0x4] sm:$0xf]
        %v583 = vld [vmem:[%s13 + $0x8] sm:$0xf]
        %v584 = vld [vmem:[%s13 + $0xc] sm:$0xf]
        %v585 = vld [vmem:[%s13 + $0x10] sm:$0xf]
        %v586 = vld [vmem:[%s13 + $0x14] sm:$0xf]
        %v587 = vld [vmem:[%s13 + $0x18] sm:$0xf]
        %v588 = vld [vmem:[%s13 + $0x1c] sm:$0xf]
        %v589 = vld [vmem:[%s13 + $0x20] sm:$0xf]
        %v590 = vld [vmem:[%s13 + $0x24] sm:$0xf]
        %v591 = vld [vmem:[%s13 + $0x28] sm:$0xf]
        %v592 = vld [vmem:[%s13 + $0x2c] sm:$0xf]
        %v593 = vld [vmem:[%s13 + $0x30] sm:$0xf]
        %v594 = vld [vmem:[%s13 + $0x34] sm:$0xf]
        %v595 = vld [vmem:[%s13 + $0x38] sm:$0xf]
        %v596 = vld [vmem:[%s13 + $0x3c] sm:$0xf]
        %v597 = vld [vmem:[%s14] sm:$0xff]
        %v598 = vld [vmem:[%s14 + $0x8] sm:$0x3]
        %v599 = vpack.c.bf16 %v539, %v539
        %v601 = vlaneseq
        %v602 = vshrl.u32 %v601, 7
        %v603 = vsub.s32 0, %v602
        %v604 = vrot.slane %v558, %v603
        %v610 = vunpack.c.l.b16 %v554
        %v611 = vunpack.c.l.b16 %v555
        %v612 = vunpack.c.l.b16 %v556
        %v613 = vunpack.c.l.b16 %v557
        %v614 = vpack.c.b16 %v611, %v610
        %v615 = vpack.c.b16 %v613, %v612
        %vm618 = vcmask 261120
        %v620 = vsel %vm618, %v599, 0
        %622 = vmatprep.subr.bf16.mxu0 0
        %623 = vmatpush1.bf16.msra.mxu0 0
        %624 = vmatprep.subr.bf16.mxu0 0
        %625 = vmatpush1.bf16.msra.mxu0 0
        %626 = vmatprep.subr.bf16.mxu0 0
        %627 = vmatpush1.bf16.msra.mxu0 0
        %628 = vmatprep.subr.bf16.mxu0 0
        %629 = vmatpush1.bf16.msra.mxu0 0
        %630 = vmatprep.subr.bf16.mxu0 0
        %631 = vmatpush1.bf16.msra.mxu0 0
        %632 = vmatprep.subr.bf16.mxu0 0
        %633 = vmatpush1.bf16.msra.mxu0 0
        %634 = vmatprep.subr.bf16.mxu0 0
        %635 = vmatpush1.bf16.msra.mxu0 %v615
        %636 = vmatprep.subr.bf16.mxu0 0
        %637 = vmatpush1.bf16.msra.mxu0 %v614
        %638 = vmatprep.subr.bf16.mxu0 0
        %639 = vmatpush2.bf16.msra.mxu0 0
        %640 = vmatprep.subr.bf16.mxu0 0
        %641 = vmatpush2.bf16.msra.mxu0 0
        %642 = vmatprep.subr.bf16.mxu0 0
        %643 = vmatpush2.bf16.msra.mxu0 0
        %644 = vmatprep.subr.bf16.mxu0 0
        %645 = vmatpush2.bf16.msra.mxu0 0
        %646 = vmatprep.subr.bf16.mxu0 0
        %647 = vmatpush2.bf16.msra.mxu0 0
        %648 = vmatprep.subr.bf16.mxu0 0
        %649 = vmatpush2.bf16.msra.mxu0 0
        %650 = vmatprep.subr.bf16.mxu0 0
        %651 = vmatpush2.bf16.msra.mxu0 0
        %652 = vmatprep.subr.bf16.mxu0 0
        %653 = vmatpush2.bf16.msra.mxu0 0
        %654 = vmatprep.mubr.bf16.mxu0 0
        %655 = vmatmul.mubr.bf16.gmra.mxu0 %v620
        %v656 = vpop.f32.mrf.mxu0
        %v657 = vadd.f32 %v604, %v656
        %v658 = vpop.f32.mrf.mxu0
        %v659 = vpop.f32.mrf.mxu0
        %v660 = vpop.f32.mrf.mxu0
        %661 = vdwg.mxu0
        %v662 = vpack.c.bf16 %v657, %v657
        %667 = vrot.lane.b32.xlu0 %v544, 32
        %v668 = vpop.permute.xlu0 %667
        %669 = vrot.lane.b32.xlu0 %v545, 32
        %v670 = vpop.permute.xlu0 %669
        %671 = vrot.lane.b32.xlu0 %v546, 32
        %v672 = vpop.permute.xlu0 %671
        %673 = vrot.lane.b32.xlu0 %v547, 32
        %v674 = vpop.permute.xlu0 %673
        %v679 = vmul.f32 %v657, %v668
        %v680 = vmul.f32 %v657, %v670
        %v681 = vmul.f32 %v657, %v672
        %v682 = vmul.f32 %v657, %v674
        %v683 = vpack.c.bf16 %v680, %v679
        %v684 = vpack.c.bf16 %v682, %v681
        %685 = vrot.lane.b32.xlu0 %v544, 64
        %v686 = vpop.permute.xlu0 %685
        %687 = vrot.lane.b32.xlu0 %v545, 64
        %v688 = vpop.permute.xlu0 %687
        %689 = vrot.lane.b32.xlu0 %v546, 64
        %v690 = vpop.permute.xlu0 %689
        %691 = vrot.lane.b32.xlu0 %v547, 64
        %v692 = vpop.permute.xlu0 %691
        %v697 = vmul.f32 %v657, %v686
        %v698 = vmul.f32 %v657, %v688
        %v699 = vmul.f32 %v657, %v690
        %v700 = vmul.f32 %v657, %v692
        %705 = vrot.lane.b32.xlu0 %v697, 64
        %v706 = vpop.permute.xlu0 %705
        %707 = vrot.lane.b32.xlu0 %v698, 64
        %v708 = vpop.permute.xlu0 %707
        %709 = vrot.lane.b32.xlu0 %v699, 64
        %v710 = vpop.permute.xlu0 %709
        %711 = vrot.lane.b32.xlu0 %v700, 64
        %v712 = vpop.permute.xlu0 %711
        %v717 = vsel %vm618, %v706, %v668
        %v718 = vsel %vm618, %v708, %v670
        %v719 = vsel %vm618, %v710, %v672
        %v720 = vsel %vm618, %v712, %v674
        %v721 = vpack.c.bf16 %v718, %v717
        %v722 = vpack.c.bf16 %v720, %v719
        %v724 = vlaneseq
        %v725 = vshrl.u32 %v724, 7
        %v726 = vsub.s32 0, %v725
        %v727 = vrot.slane %v542, %v726
        %731 = vrot.lane.b32.xlu0 %v683, 96
        %v732 = vpop.permute.xlu0 %731
        %733 = vrot.lane.b32.xlu0 %v684, 96
        %v734 = vpop.permute.xlu0 %733
        %v736 = vsel %vm618, %v662, 0
        %v739 = vsel %vm618, %v732, 0
        %v742 = vsel %vm618, %v734, 0
        %744 = vmatprep.subr.bf16.mxu0 0
        %745 = vmatpush1.bf16.xpose.msra.mxu0 0
        %746 = vmatprep.subr.bf16.mxu0 0
        %747 = vmatpush1.bf16.xpose.msra.mxu0 0
        %748 = vmatprep.subr.bf16.mxu0 0
        %749 = vmatpush1.bf16.xpose.msra.mxu0 0
        %750 = vmatprep.subr.bf16.mxu0 0
        %751 = vmatpush1.bf16.xpose.msra.mxu0 0
        %752 = vmatprep.subr.bf16.mxu0 0
        %753 = vmatpush1.bf16.xpose.msra.mxu0 0
        %754 = vmatprep.subr.bf16.mxu0 0
        %755 = vmatpush1.bf16.xpose.msra.mxu0 0
        %756 = vmatprep.subr.bf16.mxu0 0
        %757 = vmatpush1.bf16.xpose.msra.mxu0 %v742
        %758 = vmatprep.subr.bf16.mxu0 0
        %759 = vmatpush1.bf16.xpose.msra.mxu0 %v739
        %760 = vmatprep.subr.bf16.mxu0 0
        %761 = vmatpush2.bf16.xpose.msra.mxu0 0
        %762 = vmatprep.subr.bf16.mxu0 0
        %763 = vmatpush2.bf16.xpose.msra.mxu0 0
        %764 = vmatprep.subr.bf16.mxu0 0
        %765 = vmatpush2.bf16.xpose.msra.mxu0 0
        %766 = vmatprep.subr.bf16.mxu0 0
        %767 = vmatpush2.bf16.xpose.msra.mxu0 0
        %768 = vmatprep.subr.bf16.mxu0 0
        %769 = vmatpush2.bf16.xpose.msra.mxu0 0
        %770 = vmatprep.subr.bf16.mxu0 0
        %771 = vmatpush2.bf16.xpose.msra.mxu0 0
        %772 = vmatprep.subr.bf16.mxu0 0
        %773 = vmatpush2.bf16.xpose.msra.mxu0 0
        %774 = vmatprep.subr.bf16.mxu0 0
        %775 = vmatpush2.bf16.xpose.msra.mxu0 0
        %776 = vmatprep.mubr.bf16.mxu0 0
        %777 = vmatmul.mubr.bf16.gmra.mxu0 %v736
        %v778 = vpop.f32.mrf.mxu0
        %v779 = vadd.f32 %v727, %v778
        %v780 = vpop.f32.mrf.mxu0
        %v781 = vpop.f32.mrf.mxu0
        %v782 = vpop.f32.mrf.mxu0
        %783 = vdwg.mxu0
        %v784 = vsel %vm618, %v779, -inf
        %785 = vmax.xlane.f32.xlu0 %v784
        %v786 = vpop.xlane.xlu0 %785
        %v787 = vsub.f32 %v779, %v786
        %v788 = vmul.f32 %v787, 1.442695
        %v789 = vpow.pop %v788
        %v790 = vpack.c.bf16 %v789, %v789
        %v792 = vsel %vm618, %v790, 0
        %794 = vmatprep.subr.bf16.mxu0 0
        %795 = vmatpush1.bf16.msra.mxu0 0
        %796 = vmatprep.subr.bf16.mxu0 0
        %797 = vmatpush1.bf16.msra.mxu0 0
        %798 = vmatprep.subr.bf16.mxu0 0
        %799 = vmatpush1.bf16.msra.mxu0 0
        %800 = vmatprep.subr.bf16.mxu0 0
        %801 = vmatpush1.bf16.msra.mxu0 0
        %802 = vmatprep.subr.bf16.mxu0 0
        %803 = vmatpush1.bf16.msra.mxu0 0
        %804 = vmatprep.subr.bf16.mxu0 0
        %805 = vmatpush1.bf16.msra.mxu0 0
        %806 = vmatprep.subr.bf16.mxu0 0
        %807 = vmatpush1.bf16.msra.mxu0 %v722
        %808 = vmatprep.subr.bf16.mxu0 0
        %809 = vmatpush1.bf16.msra.mxu0 %v721
        %810 = vmatprep.subr.bf16.mxu0 0
        %811 = vmatpush2.bf16.msra.mxu0 0
        %812 = vmatprep.subr.bf16.mxu0 0
        %813 = vmatpush2.bf16.msra.mxu0 0
        %814 = vmatprep.subr.bf16.mxu0 0
        %815 = vmatpush2.bf16.msra.mxu0 0
        %816 = vmatprep.subr.bf16.mxu0 0
        %817 = vmatpush2.bf16.msra.mxu0 0
        %818 = vmatprep.subr.bf16.mxu0 0
        %819 = vmatpush2.bf16.msra.mxu0 0
        %820 = vmatprep.subr.bf16.mxu0 0
        %821 = vmatpush2.bf16.msra.mxu0 0
        %822 = vmatprep.subr.bf16.mxu0 0
        %823 = vmatpush2.bf16.msra.mxu0 0
        %824 = vmatprep.subr.bf16.mxu0 0
        %825 = vmatpush2.bf16.msra.mxu0 0
        %826 = vmatprep.mubr.bf16.mxu0 0
        %827 = vmatmul.mubr.bf16.gmra.mxu0 %v792
        %v828 = vpop.f32.mrf.mxu0
        %v829 = vadd.f32 0.0, %v828
        %v830 = vpop.f32.mrf.mxu0
        %v831 = vpop.f32.mrf.mxu0
        %v832 = vpop.f32.mrf.mxu0
        %833 = vdwg.mxu0
        %v834 = vrcp.pop %v829
        %836 = vrot.lane.b32.xlu0 %v834, 96
        %v837 = vpop.permute.xlu0 %836
        %v839 = vmul.f32 %v829, %v837
        %v840 = vpack.c.bf16 %v839, %v839
        %v841 = vlaneseq
        %v842 = vshrl.u32 %v841, 7
        %v843 = vsub.s32 1, %v842
        %v844 = vrot.slane %v597, %v843
        %v849 = vunpack.c.l.b16 %v559
        %v850 = vunpack.c.l.b16 %v560
        %v851 = vunpack.c.l.b16 %v561
        %v852 = vunpack.c.l.b16 %v562
        %v853 = vpack.c.b16 %v850, %v849
        %v854 = vpack.c.b16 %v852, %v851
        %v858 = vsel %vm618, %v840, 0
        %860 = vmatprep.subr.bf16.mxu0 0
        %861 = vmatpush1.bf16.msra.mxu0 0
        %862 = vmatprep.subr.bf16.mxu0 0
        %863 = vmatpush1.bf16.msra.mxu0 0
        %864 = vmatprep.subr.bf16.mxu0 0
        %865 = vmatpush1.bf16.msra.mxu0 0
        %866 = vmatprep.subr.bf16.mxu0 0
        %867 = vmatpush1.bf16.msra.mxu0 0
        %868 = vmatprep.subr.bf16.mxu0 0
        %869 = vmatpush1.bf16.msra.mxu0 0
        %870 = vmatprep.subr.bf16.mxu0 0
        %871 = vmatpush1.bf16.msra.mxu0 0
        %872 = vmatprep.subr.bf16.mxu0 0
        %873 = vmatpush1.bf16.msra.mxu0 %v854
        %874 = vmatprep.subr.bf16.mxu0 0
        %875 = vmatpush1.bf16.msra.mxu0 %v853
        %876 = vmatprep.subr.bf16.mxu0 0
        %877 = vmatpush2.bf16.msra.mxu0 0
        %878 = vmatprep.subr.bf16.mxu0 0
        %879 = vmatpush2.bf16.msra.mxu0 0
        %880 = vmatprep.subr.bf16.mxu0 0
        %881 = vmatpush2.bf16.msra.mxu0 0
        %882 = vmatprep.subr.bf16.mxu0 0
        %883 = vmatpush2.bf16.msra.mxu0 0
        %884 = vmatprep.subr.bf16.mxu0 0
        %885 = vmatpush2.bf16.msra.mxu0 0
        %886 = vmatprep.subr.bf16.mxu0 0
        %887 = vmatpush2.bf16.msra.mxu0 0
        %888 = vmatprep.subr.bf16.mxu0 0
        %889 = vmatpush2.bf16.msra.mxu0 0
        %890 = vmatprep.subr.bf16.mxu0 0
        %891 = vmatpush2.bf16.msra.mxu0 0
        %892 = vmatprep.mubr.bf16.mxu0 0
        %893 = vmatmul.mubr.bf16.gmra.mxu0 %v858
        %v894 = vpop.f32.mrf.mxu0
        %v895 = vadd.f32 %v844, %v894
        %v896 = vpop.f32.mrf.mxu0
        %v897 = vpop.f32.mrf.mxu0
        %v898 = vpop.f32.mrf.mxu0
        %899 = vdwg.mxu0
        %v900 = vadd.f32 %v539, %v895
        %v901 = vsel %vm618, %v900, 0.0
        %902 = vadd.xlane.f32.xlu0 %v901
        %v903 = vpop.xlane.xlu0 %902
        %v904 = vrcp.pop 32.0
        %v905 = vmul.f32 %v903, %v904
        %v906 = vsub.f32 %v900, %v905
        %v907 = vmul.f32 %v906, %v906
        %v908 = vsel %vm618, %v907, 0.0
        %909 = vadd.xlane.f32.xlu0 %v908
        %v910 = vpop.xlane.xlu0 %909
        %v911 = vrcp.pop 31.0
        %v912 = vmul.f32 %v910, %v911
        %v913 = vrsqrt.pop %v912
        %v914 = vmul.f32 %v912, %v913
        %vm915 = vcmp.eq.f32.partialorder %v912, inf
        %v916 = vsel %vm915, %v912, %v914
        %vm917 = vcmp.eq.f32.partialorder %v912, 0.0
        %v918 = vand.u32 %v912, 2147483648
        %v919 = vsel %vm917, %v918, %v916
        %v920 = vadd.f32 %v919, 1e-06
        %v921 = vrcp.pop %v920
        %v922 = vlaneseq
        %v923 = vshrl.u32 %v922, 7
        %v924 = vsub.s32 4, %v923
        %v925 = vrot.slane %v597, %v924
        %v926 = vmul.f32 %v925, %v906
        %v927 = vmul.f32 %v926, %v921
        %v928 = vlaneseq
        %v929 = vshrl.u32 %v928, 7
        %v930 = vsub.s32 5, %v929
        %v931 = vrot.slane %v597, %v930
        %v932 = vadd.f32 %v927, %v931
        %v933 = vpack.c.bf16 %v932, %v932
        %v934 = vlaneseq
        %v935 = vshrl.u32 %v934, 7
        %v936 = vsub.s32 0, %v935
        %v937 = vrot.slane %v597, %v936
        %v942 = vunpack.c.l.b16 %v563
        %v943 = vunpack.c.l.b16 %v564
        %v944 = vunpack.c.l.b16 %v565
        %v945 = vunpack.c.l.b16 %v566
        %v946 = vpack.c.b16 %v943, %v942
        %v947 = vpack.c.b16 %v945, %v944
        %v951 = vsel %vm618, %v933, 0
        %953 = vmatprep.subr.bf16.mxu0 0
        %954 = vmatpush1.bf16.msra.mxu0 0
        %955 = vmatprep.subr.bf16.mxu0 0
        %956 = vmatpush1.bf16.msra.mxu0 0
        %957 = vmatprep.subr.bf16.mxu0 0
        %958 = vmatpush1.bf16.msra.mxu0 0
        %959 = vmatprep.subr.bf16.mxu0 0
        %960 = vmatpush1.bf16.msra.mxu0 0
        %961 = vmatprep.subr.bf16.mxu0 0
        %962 = vmatpush1.bf16.msra.mxu0 0
        %963 = vmatprep.subr.bf16.mxu0 0
        %964 = vmatpush1.bf16.msra.mxu0 0
        %965 = vmatprep.subr.bf16.mxu0 0
        %966 = vmatpush1.bf16.msra.mxu0 %v947
        %967 = vmatprep.subr.bf16.mxu0 0
        %968 = vmatpush1.bf16.msra.mxu0 %v946
        %969 = vmatprep.subr.bf16.mxu0 0
        %970 = vmatpush2.bf16.msra.mxu0 0
        %971 = vmatprep.subr.bf16.mxu0 0
        %972 = vmatpush2.bf16.msra.mxu0 0
        %973 = vmatprep.subr.bf16.mxu0 0
        %974 = vmatpush2.bf16.msra.mxu0 0
        %975 = vmatprep.subr.bf16.mxu0 0
        %976 = vmatpush2.bf16.msra.mxu0 0
        %977 = vmatprep.subr.bf16.mxu0 0
        %978 = vmatpush2.bf16.msra.mxu0 0
        %979 = vmatprep.subr.bf16.mxu0 0
        %980 = vmatpush2.bf16.msra.mxu0 0
        %981 = vmatprep.subr.bf16.mxu0 0
        %982 = vmatpush2.bf16.msra.mxu0 0
        %983 = vmatprep.subr.bf16.mxu0 0
        %984 = vmatpush2.bf16.msra.mxu0 0
        %985 = vmatprep.mubr.bf16.mxu0 0
        %986 = vmatmul.mubr.bf16.gmra.mxu0 %v951
        %v987 = vpop.f32.mrf.mxu0
        %v988 = vadd.f32 %v937, %v987
        %v989 = vpop.f32.mrf.mxu0
        %v990 = vpop.f32.mrf.mxu0
        %v991 = vpop.f32.mrf.mxu0
        %992 = vdwg.mxu0
        %v993 = vpack.c.bf16 %v541, %v540
        %v995 = vlaneseq
        %v996 = vshrl.u32 %v995, 7
        %v997 = vsub.s32 0, %v996
        %v998 = vrot.slane %v575, %v997
        %v1004 = vunpack.c.l.b16 %v571
        %v1005 = vunpack.c.l.b16 %v572
        %v1006 = vunpack.c.l.b16 %v573
        %v1007 = vunpack.c.l.b16 %v574
        %v1008 = vpack.c.b16 %v1005, %v1004
        %v1009 = vpack.c.b16 %v1007, %v1006
        %v1013 = vsel %vm618, %v993, 0
        %1015 = vmatprep.subr.bf16.mxu0 0
        %1016 = vmatpush1.bf16.msra.mxu0 0
        %1017 = vmatprep.subr.bf16.mxu0 0
        %1018 = vmatpush1.bf16.msra.mxu0 0
        %1019 = vmatprep.subr.bf16.mxu0 0
        %1020 = vmatpush1.bf16.msra.mxu0 0
        %1021 = vmatprep.subr.bf16.mxu0 0
        %1022 = vmatpush1.bf16.msra.mxu0 0
        %1023 = vmatprep.subr.bf16.mxu0 0
        %1024 = vmatpush1.bf16.msra.mxu0 0
        %1025 = vmatprep.subr.bf16.mxu0 0
        %1026 = vmatpush1.bf16.msra.mxu0 0
        %1027 = vmatprep.subr.bf16.mxu0 0
        %1028 = vmatpush1.bf16.msra.mxu0 %v1009
        %1029 = vmatprep.subr.bf16.mxu0 0
        %1030 = vmatpush1.bf16.msra.mxu0 %v1008
        %1031 = vmatprep.subr.bf16.mxu0 0
        %1032 = vmatpush2.bf16.msra.mxu0 0
        %1033 = vmatprep.subr.bf16.mxu0 0
        %1034 = vmatpush2.bf16.msra.mxu0 0
        %1035 = vmatprep.subr.bf16.mxu0 0
        %1036 = vmatpush2.bf16.msra.mxu0 0
        %1037 = vmatprep.subr.bf16.mxu0 0
        %1038 = vmatpush2.bf16.msra.mxu0 0
        %1039 = vmatprep.subr.bf16.mxu0 0
        %1040 = vmatpush2.bf16.msra.mxu0 0
        %1041 = vmatprep.subr.bf16.mxu0 0
        %1042 = vmatpush2.bf16.msra.mxu0 0
        %1043 = vmatprep.subr.bf16.mxu0 0
        %1044 = vmatpush2.bf16.msra.mxu0 0
        %1045 = vmatprep.subr.bf16.mxu0 0
        %1046 = vmatpush2.bf16.msra.mxu0 0
        %1047 = vmatprep.mubr.bf16.mxu0 0
        %1048 = vmatmul.mubr.bf16.gmra.mxu0 %v1013
        %v1049 = vpop.f32.mrf.mxu0
        %v1050 = vadd.f32 %v998, %v1049
        %v1051 = vpop.f32.mrf.mxu0
        %v1052 = vpop.f32.mrf.mxu0
        %v1053 = vadd.f32 %v998, %v1052
        %v1054 = vpop.f32.mrf.mxu0
        %1055 = vdwg.mxu0
        %v1056 = vpack.c.bf16 %v988, %v988
        %vm1059 = vcmask 1043456
        %v1060 = vrot.slane %v1050, 4
        %v1061 = vrot.slane %v1053, 4
        %v1062 = vsel %vm1059, %v1060, %v1061
        %v1065 = vsel %vm1059, %v1053, %v1060
        %v1066 = vmul.f32 %v1050, %v548
        %v1067 = vmul.f32 %v1065, %v549
        %v1068 = vmul.f32 %v1062, %v550
        %v1069 = vmul.f32 %v1050, %v551
        %v1070 = vmul.f32 %v1065, %v552
        %v1071 = vmul.f32 %v1062, %v553
        %v1072 = vpack.c.bf16 %v1067, %v1066
        %v1073 = vpack.c.bf16 %v1069, %v1068
        %v1074 = vpack.c.bf16 %v1071, %v1070
        %1081 = vrot.lane.b32.xlu0 %v548, 32
        %v1082 = vpop.permute.xlu0 %1081
        %1083 = vrot.lane.b32.xlu0 %v549, 32
        %v1084 = vpop.permute.xlu0 %1083
        %1085 = vrot.lane.b32.xlu0 %v550, 32
        %v1086 = vpop.permute.xlu0 %1085
        %1087 = vrot.lane.b32.xlu0 %v551, 32
        %v1088 = vpop.permute.xlu0 %1087
        %1089 = vrot.lane.b32.xlu0 %v552, 32
        %v1090 = vpop.permute.xlu0 %1089
        %1091 = vrot.lane.b32.xlu0 %v553, 32
        %v1092 = vpop.permute.xlu0 %1091
        %v1099 = vmul.f32 %v1050, %v1082
        %v1100 = vmul.f32 %v1065, %v1084
        %v1101 = vmul.f32 %v1062, %v1086
        %v1102 = vmul.f32 %v1050, %v1088
        %v1103 = vmul.f32 %v1065, %v1090
        %v1104 = vmul.f32 %v1062, %v1092
        %1111 = vrot.lane.b32.xlu0 %v1099, 96
        %v1112 = vpop.permute.xlu0 %1111
        %1113 = vrot.lane.b32.xlu0 %v1100, 96
        %v1114 = vpop.permute.xlu0 %1113
        %1115 = vrot.lane.b32.xlu0 %v1101, 96
        %v1116 = vpop.permute.xlu0 %1115
        %1117 = vrot.lane.b32.xlu0 %v1102, 96
        %v1118 = vpop.permute.xlu0 %1117
        %1119 = vrot.lane.b32.xlu0 %v1103, 96
        %v1120 = vpop.permute.xlu0 %1119
        %1121 = vrot.lane.b32.xlu0 %v1104, 96
        %v1122 = vpop.permute.xlu0 %1121
        %v1129 = vsel %vm618, %v1112, %v1082
        %v1130 = vsel %vm618, %v1114, %v1084
        %v1131 = vsel %vm618, %v1116, %v1086
        %v1132 = vsel %vm618, %v1118, %v1088
        %v1133 = vsel %vm618, %v1120, %v1090
        %v1134 = vsel %vm618, %v1122, %v1092
        %v1135 = vpack.c.bf16 %v1130, %v1129
        %v1136 = vpack.c.bf16 %v1132, %v1131
        %v1137 = vpack.c.bf16 %v1134, %v1133
        %v1139 = vlaneseq
        %v1140 = vshrl.u32 %v1139, 7
        %v1141 = vsub.s32 0, %v1140
        %v1142 = vrot.slane %v543, %v1141
        %v1145 = vsel %vm618, %v1056, 0
        %v1148 = vsel %vm618, %v1072, 0
        %v1151 = vsel %vm618, %v1073, 0
        %v1154 = vsel %vm618, %v1074, 0
        %1156 = vmatprep.subr.bf16.mxu0 0
        %1157 = vmatpush1.bf16.xpose.msra.mxu0 0
        %1158 = vmatprep.subr.bf16.mxu0 0
        %1159 = vmatpush1.bf16.xpose.msra.mxu0 0
        %1160 = vmatprep.subr.bf16.mxu0 0
        %1161 = vmatpush1.bf16.xpose.msra.mxu0 0
        %1162 = vmatprep.subr.bf16.mxu0 0
        %1163 = vmatpush1.bf16.xpose.msra.mxu0 0
        %1164 = vmatprep.subr.bf16.mxu0 0
        %1165 = vmatpush1.bf16.xpose.msra.mxu0 0
        %1166 = vmatprep.subr.bf16.mxu0 0
        %1167 = vmatpush1.bf16.xpose.msra.mxu0 %v1154
        %1168 = vmatprep.subr.bf16.mxu0 0
        %1169 = vmatpush1.bf16.xpose.msra.mxu0 %v1151
        %1170 = vmatprep.subr.bf16.mxu0 0
        %1171 = vmatpush1.bf16.xpose.msra.mxu0 %v1148
        %1172 = vmatprep.subr.bf16.mxu0 0
        %1173 = vmatpush2.bf16.xpose.msra.mxu0 0
        %1174 = vmatprep.subr.bf16.mxu0 0
        %1175 = vmatpush2.bf16.xpose.msra.mxu0 0
        %1176 = vmatprep.subr.bf16.mxu0 0
        %1177 = vmatpush2.bf16.xpose.msra.mxu0 0
        %1178 = vmatprep.subr.bf16.mxu0 0
        %1179 = vmatpush2.bf16.xpose.msra.mxu0 0
        %1180 = vmatprep.subr.bf16.mxu0 0
        %1181 = vmatpush2.bf16.xpose.msra.mxu0 0
        %1182 = vmatprep.subr.bf16.mxu0 0
        %1183 = vmatpush2.bf16.xpose.msra.mxu0 0
        %1184 = vmatprep.subr.bf16.mxu0 0
        %1185 = vmatpush2.bf16.xpose.msra.mxu0 0
        %1186 = vmatprep.subr.bf16.mxu0 0
        %1187 = vmatpush2.bf16.xpose.msra.mxu0 0
        %1188 = vmatprep.mubr.bf16.mxu0 0
        %1189 = vmatmul.mubr.bf16.gmra.mxu0 %v1145
        %v1190 = vpop.f32.mrf.mxu0
        %v1191 = vadd.f32 %v1142, %v1190
        %v1192 = vpop.f32.mrf.mxu0
        %v1193 = vpop.f32.mrf.mxu0
        %v1194 = vpop.f32.mrf.mxu0
        %1195 = vdwg.mxu0
        %vm1196 = vcmask 392192
        %v1197 = vsel %vm1196, %v1191, -inf
        %1198 = vmax.xlane.f32.xlu0 %v1197
        %v1199 = vpop.xlane.xlu0 %1198
        %v1200 = vsub.f32 %v1191, %v1199
        %v1201 = vmul.f32 %v1200, 1.442695
        %v1202 = vpow.pop %v1201
        %v1203 = vpack.c.bf16 %v1202, %v1202
        %v1205 = vsel %vm1196, %v1203, 0
        %1207 = vmatprep.subr.bf16.mxu0 0
        %1208 = vmatpush1.bf16.msra.mxu0 0
        %1209 = vmatprep.subr.bf16.mxu0 0
        %1210 = vmatpush1.bf16.msra.mxu0 0
        %1211 = vmatprep.subr.bf16.mxu0 0
        %1212 = vmatpush1.bf16.msra.mxu0 0
        %1213 = vmatprep.subr.bf16.mxu0 0
        %1214 = vmatpush1.bf16.msra.mxu0 0
        %1215 = vmatprep.subr.bf16.mxu0 0
        %1216 = vmatpush1.bf16.msra.mxu0 0
        %1217 = vmatprep.subr.bf16.mxu0 0
        %1218 = vmatpush1.bf16.msra.mxu0 %v1137
        %1219 = vmatprep.subr.bf16.mxu0 0
        %1220 = vmatpush1.bf16.msra.mxu0 %v1136
        %1221 = vmatprep.subr.bf16.mxu0 0
        %1222 = vmatpush1.bf16.msra.mxu0 %v1135
        %1223 = vmatprep.subr.bf16.mxu0 0
        %1224 = vmatpush2.bf16.msra.mxu0 0
        %1225 = vmatprep.subr.bf16.mxu0 0
        %1226 = vmatpush2.bf16.msra.mxu0 0
        %1227 = vmatprep.subr.bf16.mxu0 0
        %1228 = vmatpush2.bf16.msra.mxu0 0
        %1229 = vmatprep.subr.bf16.mxu0 0
        %1230 = vmatpush2.bf16.msra.mxu0 0
        %1231 = vmatprep.subr.bf16.mxu0 0
        %1232 = vmatpush2.bf16.msra.mxu0 0
        %1233 = vmatprep.subr.bf16.mxu0 0
        %1234 = vmatpush2.bf16.msra.mxu0 0
        %1235 = vmatprep.subr.bf16.mxu0 0
        %1236 = vmatpush2.bf16.msra.mxu0 0
        %1237 = vmatprep.subr.bf16.mxu0 0
        %1238 = vmatpush2.bf16.msra.mxu0 0
        %1239 = vmatprep.mubr.bf16.mxu0 0
        %1240 = vmatmul.mubr.bf16.gmra.mxu0 %v1205
        %v1241 = vpop.f32.mrf.mxu0
        %v1242 = vadd.f32 0.0, %v1241
        %v1243 = vpop.f32.mrf.mxu0
        %v1244 = vpop.f32.mrf.mxu0
        %v1245 = vpop.f32.mrf.mxu0
        %1246 = vdwg.mxu0
        %v1247 = vrcp.pop %v1242
        %1249 = vrot.lane.b32.xlu0 %v1247, 96
        %v1250 = vpop.permute.xlu0 %1249
        %v1252 = vmul.f32 %v1242, %v1250
        %v1253 = vpack.c.bf16 %v1252, %v1252
        %v1254 = vlaneseq
        %v1255 = vshrl.u32 %v1254, 7
        %v1256 = vsub.s32 2, %v1255
        %v1257 = vrot.slane %v597, %v1256
        %v1262 = vunpack.c.l.b16 %v567
        %v1263 = vunpack.c.l.b16 %v568
        %v1264 = vunpack.c.l.b16 %v569
        %v1265 = vunpack.c.l.b16 %v570
        %v1266 = vpack.c.b16 %v1263, %v1262
        %v1267 = vpack.c.b16 %v1265, %v1264
        %v1271 = vsel %vm618, %v1253, 0
        %1273 = vmatprep.subr.bf16.mxu0 0
        %1274 = vmatpush1.bf16.msra.mxu0 0
        %1275 = vmatprep.subr.bf16.mxu0 0
        %1276 = vmatpush1.bf16.msra.mxu0 0
        %1277 = vmatprep.subr.bf16.mxu0 0
        %1278 = vmatpush1.bf16.msra.mxu0 0
        %1279 = vmatprep.subr.bf16.mxu0 0
        %1280 = vmatpush1.bf16.msra.mxu0 0
        %1281 = vmatprep.subr.bf16.mxu0 0
        %1282 = vmatpush1.bf16.msra.mxu0 0
        %1283 = vmatprep.subr.bf16.mxu0 0
        %1284 = vmatpush1.bf16.msra.mxu0 0
        %1285 = vmatprep.subr.bf16.mxu0 0
        %1286 = vmatpush1.bf16.msra.mxu0 %v1267
        %1287 = vmatprep.subr.bf16.mxu0 0
        %1288 = vmatpush1.bf16.msra.mxu0 %v1266
        %1289 = vmatprep.subr.bf16.mxu0 0
        %1290 = vmatpush2.bf16.msra.mxu0 0
        %1291 = vmatprep.subr.bf16.mxu0 0
        %1292 = vmatpush2.bf16.msra.mxu0 0
        %1293 = vmatprep.subr.bf16.mxu0 0
        %1294 = vmatpush2.bf16.msra.mxu0 0
        %1295 = vmatprep.subr.bf16.mxu0 0
        %1296 = vmatpush2.bf16.msra.mxu0 0
        %1297 = vmatprep.subr.bf16.mxu0 0
        %1298 = vmatpush2.bf16.msra.mxu0 0
        %1299 = vmatprep.subr.bf16.mxu0 0
        %1300 = vmatpush2.bf16.msra.mxu0 0
        %1301 = vmatprep.subr.bf16.mxu0 0
        %1302 = vmatpush2.bf16.msra.mxu0 0
        %1303 = vmatprep.subr.bf16.mxu0 0
        %1304 = vmatpush2.bf16.msra.mxu0 0
        %1305 = vmatprep.mubr.bf16.mxu0 0
        %1306 = vmatmul.mubr.bf16.gmra.mxu0 %v1271
        %v1307 = vpop.f32.mrf.mxu0
        %v1308 = vadd.f32 %v1257, %v1307
        %v1309 = vpop.f32.mrf.mxu0
        %v1310 = vpop.f32.mrf.mxu0
        %v1311 = vpop.f32.mrf.mxu0
        %1312 = vdwg.mxu0
        %v1313 = vadd.f32 %v932, %v1308
        %v1314 = vsel %vm618, %v1313, 0.0
        %1315 = vadd.xlane.f32.xlu0 %v1314
        %v1316 = vpop.xlane.xlu0 %1315
        %v1317 = vmul.f32 %v1316, %v904
        %v1318 = vsub.f32 %v1313, %v1317
        %v1319 = vmul.f32 %v1318, %v1318
        %v1320 = vsel %vm618, %v1319, 0.0
        %1321 = vadd.xlane.f32.xlu0 %v1320
        %v1322 = vpop.xlane.xlu0 %1321
        %v1323 = vmul.f32 %v1322, %v911
        %v1324 = vrsqrt.pop %v1323
        %v1325 = vmul.f32 %v1323, %v1324
        %vm1326 = vcmp.eq.f32.partialorder %v1323, inf
        %v1327 = vsel %vm1326, %v1323, %v1325
        %vm1328 = vcmp.eq.f32.partialorder %v1323, 0.0
        %v1329 = vand.u32 %v1323, 2147483648
        %v1330 = vsel %vm1328, %v1329, %v1327
        %v1331 = vadd.f32 %v1330, 1e-06
        %v1332 = vrcp.pop %v1331
        %v1333 = vlaneseq
        %v1334 = vshrl.u32 %v1333, 7
        %v1335 = vsub.s32 6, %v1334
        %v1336 = vrot.slane %v597, %v1335
        %v1337 = vmul.f32 %v1336, %v1318
        %v1338 = vmul.f32 %v1337, %v1332
        %v1339 = vlaneseq
        %v1340 = vshrl.u32 %v1339, 7
        %v1341 = vsub.s32 7, %v1340
        %v1342 = vrot.slane %v597, %v1341
        %v1343 = vadd.f32 %v1338, %v1342
        %v1344 = vpack.c.bf16 %v1343, %v1343
        %v1346 = vlaneseq
        %v1347 = vshrl.u32 %v1346, 7
        %v1348 = vsub.s32 0, %v1347
        %v1349 = vrot.slane %v580, %v1348
        %v1355 = vunpack.c.l.b16 %v576
        %v1356 = vunpack.c.l.b16 %v577
        %v1357 = vunpack.c.l.b16 %v578
        %v1358 = vunpack.c.l.b16 %v579
        %v1359 = vpack.c.b16 %v1356, %v1355
        %v1360 = vpack.c.b16 %v1358, %v1357
        %v1364 = vsel %vm618, %v1344, 0
        %1366 = vmatprep.subr.bf16.mxu0 0
        %1367 = vmatpush1.bf16.msra.mxu0 0
        %1368 = vmatprep.subr.bf16.mxu0 0
        %1369 = vmatpush1.bf16.msra.mxu0 0
        %1370 = vmatprep.subr.bf16.mxu0 0
        %1371 = vmatpush1.bf16.msra.mxu0 0
        %1372 = vmatprep.subr.bf16.mxu0 0
        %1373 = vmatpush1.bf16.msra.mxu0 0
        %1374 = vmatprep.subr.bf16.mxu0 0
        %1375 = vmatpush1.bf16.msra.mxu0 0
        %1376 = vmatprep.subr.bf16.mxu0 0
        %1377 = vmatpush1.bf16.msra.mxu0 0
        %1378 = vmatprep.subr.bf16.mxu0 0
        %1379 = vmatpush1.bf16.msra.mxu0 %v1360
        %1380 = vmatprep.subr.bf16.mxu0 0
        %1381 = vmatpush1.bf16.msra.mxu0 %v1359
        %1382 = vmatprep.subr.bf16.mxu0 0
        %1383 = vmatpush2.bf16.msra.mxu0 0
        %1384 = vmatprep.subr.bf16.mxu0 0
        %1385 = vmatpush2.bf16.msra.mxu0 0
        %1386 = vmatprep.subr.bf16.mxu0 0
        %1387 = vmatpush2.bf16.msra.mxu0 0
        %1388 = vmatprep.subr.bf16.mxu0 0
        %1389 = vmatpush2.bf16.msra.mxu0 0
        %1390 = vmatprep.subr.bf16.mxu0 0
        %1391 = vmatpush2.bf16.msra.mxu0 0
        %1392 = vmatprep.subr.bf16.mxu0 0
        %1393 = vmatpush2.bf16.msra.mxu0 0
        %1394 = vmatprep.subr.bf16.mxu0 0
        %1395 = vmatpush2.bf16.msra.mxu0 0
        %1396 = vmatprep.subr.bf16.mxu0 0
        %1397 = vmatpush2.bf16.msra.mxu0 0
        %1398 = vmatprep.mubr.bf16.mxu0 0
        %1399 = vmatmul.mubr.bf16.gmra.mxu0 %v1364
        %v1400 = vpop.f32.mrf.mxu0
        %v1401 = vadd.f32 %v1349, %v1400
        %v1402 = vpop.f32.mrf.mxu0
        %v1403 = vpop.f32.mrf.mxu0
        %v1404 = vpop.f32.mrf.mxu0
        %1405 = vdwg.mxu0
        %v1406 = vmax.f32 %v1401, 0.0
        %v1407 = vpack.c.bf16 %v1406, %v1406
        %v1408 = vlaneseq
        %v1409 = vshrl.u32 %v1408, 7
        %v1410 = vsub.s32 3, %v1409
        %v1411 = vrot.slane %v597, %v1410
        %v1428 = vunpack.c.l.b16 %v581
        %v1429 = vunpack.c.l.b16 %v582
        %v1430 = vunpack.c.l.b16 %v583
        %v1431 = vunpack.c.l.b16 %v584
        %v1432 = vunpack.c.l.b16 %v585
        %v1433 = vunpack.c.l.b16 %v586
        %v1434 = vunpack.c.l.b16 %v587
        %v1435 = vunpack.c.l.b16 %v588
        %v1436 = vunpack.c.l.b16 %v589
        %v1437 = vunpack.c.l.b16 %v590
        %v1438 = vunpack.c.l.b16 %v591
        %v1439 = vunpack.c.l.b16 %v592
        %v1440 = vunpack.c.l.b16 %v593
        %v1441 = vunpack.c.l.b16 %v594
        %v1442 = vunpack.c.l.b16 %v595
        %v1443 = vunpack.c.l.b16 %v596
        %v1444 = vpack.c.b16 %v1429, %v1428
        %v1445 = vpack.c.b16 %v1431, %v1430
        %v1446 = vpack.c.b16 %v1433, %v1432
        %v1447 = vpack.c.b16 %v1435, %v1434
        %v1448 = vpack.c.b16 %v1437, %v1436
        %v1449 = vpack.c.b16 %v1439, %v1438
        %v1450 = vpack.c.b16 %v1441, %v1440
        %v1451 = vpack.c.b16 %v1443, %v1442
        %1460 = vmatprep.subr.bf16.mxu0 0
        %1461 = vmatpush1.bf16.msra.mxu0 %v1451
        %1462 = vmatprep.subr.bf16.mxu0 0
        %1463 = vmatpush1.bf16.msra.mxu0 %v1450
        %1464 = vmatprep.subr.bf16.mxu0 0
        %1465 = vmatpush1.bf16.msra.mxu0 %v1449
        %1466 = vmatprep.subr.bf16.mxu0 0
        %1467 = vmatpush1.bf16.msra.mxu0 %v1448
        %1468 = vmatprep.subr.bf16.mxu0 0
        %1469 = vmatpush1.bf16.msra.mxu0 %v1447
        %1470 = vmatprep.subr.bf16.mxu0 0
        %1471 = vmatpush1.bf16.msra.mxu0 %v1446
        %1472 = vmatprep.subr.bf16.mxu0 0
        %1473 = vmatpush1.bf16.msra.mxu0 %v1445
        %1474 = vmatprep.subr.bf16.mxu0 0
        %1475 = vmatpush1.bf16.msra.mxu0 %v1444
        %1476 = vmatprep.subr.bf16.mxu0 0
        %1477 = vmatpush2.bf16.msra.mxu0 0
        %1478 = vmatprep.subr.bf16.mxu0 0
        %1479 = vmatpush2.bf16.msra.mxu0 0
        %1480 = vmatprep.subr.bf16.mxu0 0
        %1481 = vmatpush2.bf16.msra.mxu0 0
        %1482 = vmatprep.subr.bf16.mxu0 0
        %1483 = vmatpush2.bf16.msra.mxu0 0
        %1484 = vmatprep.subr.bf16.mxu0 0
        %1485 = vmatpush2.bf16.msra.mxu0 0
        %1486 = vmatprep.subr.bf16.mxu0 0
        %1487 = vmatpush2.bf16.msra.mxu0 0
        %1488 = vmatprep.subr.bf16.mxu0 0
        %1489 = vmatpush2.bf16.msra.mxu0 0
        %1490 = vmatprep.subr.bf16.mxu0 0
        %1491 = vmatpush2.bf16.msra.mxu0 0
        %1492 = vmatprep.mubr.bf16.mxu0 0
        %1493 = vmatmul.mubr.bf16.gmra.mxu0 %v1407
        %v1494 = vpop.f32.mrf.mxu0
        %v1495 = vadd.f32 %v1411, %v1494
        %v1496 = vpop.f32.mrf.mxu0
        %v1497 = vpop.f32.mrf.mxu0
        %v1498 = vpop.f32.mrf.mxu0
        %1499 = vdwg.mxu0
        %v1500 = vadd.f32 %v1343, %v1495
        %v1501 = vsel %vm618, %v1500, 0.0
        %1502 = vadd.xlane.f32.xlu0 %v1501
        %v1503 = vpop.xlane.xlu0 %1502
        %v1504 = vmul.f32 %v1503, %v904
        %v1505 = vsub.f32 %v1500, %v1504
        %v1506 = vmul.f32 %v1505, %v1505
        %v1507 = vsel %vm618, %v1506, 0.0
        %1508 = vadd.xlane.f32.xlu0 %v1507
        %v1509 = vpop.xlane.xlu0 %1508
        %v1510 = vmul.f32 %v1509, %v911
        %v1511 = vrsqrt.pop %v1510
        %v1512 = vmul.f32 %v1510, %v1511
        %vm1513 = vcmp.eq.f32.partialorder %v1510, inf
        %v1514 = vsel %vm1513, %v1510, %v1512
        %vm1515 = vcmp.eq.f32.partialorder %v1510, 0.0
        %v1516 = vand.u32 %v1510, 2147483648
        %v1517 = vsel %vm1515, %v1516, %v1514
        %v1518 = vadd.f32 %v1517, 1e-06
        %v1519 = vrcp.pop %v1518
        %v1520 = vlaneseq
        %v1521 = vshrl.u32 %v1520, 7
        %v1522 = vsub.s32 0, %v1521
        %v1523 = vrot.slane %v598, %v1522
        %v1524 = vmul.f32 %v1523, %v1505
        %v1525 = vmul.f32 %v1524, %v1519
        %v1526 = vlaneseq
        %v1527 = vshrl.u32 %v1526, 7
        %v1528 = vsub.s32 1, %v1527
        %v1529 = vrot.slane %v598, %v1528
        %v1530 = vadd.f32 %v1525, %v1529
        %1531 = vst.msk [vmem:[%s522] sm:$0xff] %vm618, %v1530
        %s1532 = sand.u32 %s372, 1
        %s1533 = scalar_lea.sflag [#allocation3], %s1532
        %s1534 = sand.u32 %s372, 1
        %s1535 = smul.addr %s1534, 8
        %s1536 = scalar_lea.vmem [#allocation2], %s1535
        // Predicated region
        $region81: #{tpu_custom_call.1} parent=79 // pred_check
          %p1537 = pneg %p382
        $region82: #{tpu_custom_call.1} parent=79 // pred_check_branch
          %1539 = sbr.rel (%p1537) target = $region84
        $region83: #{tpu_custom_call.1} parent=79 // pred_region
          %s1541 = ssub.s32 128, 128
          %1542 = vsyncadd %s1533, %s1541
          %s1543 = smul.addr %s29, 128
          %s1544 = scalar_lea.hbm %s15, %s1543
          %s1546 = sshll.u32 %s1536, 4
          %s1547 = int_to_ptr.vmem [resolvable:$true] %s1546
          %1549 = dma.vmem_to_hbm [thread:$0]  %s1547, 128, %s1544, %s1533
        $region84: #{tpu_custom_call.1} parent=79 // pred_fallthru
          _
      $region80: #{tpu_custom_call.1} parent=5 // pred_fallthru
        _
      %p1550 = scmp.le.s32.totalorder 2, %s24
      // Predicated region
      $region85: #{tpu_custom_call.1} parent=5 // pred_check
        %p1551 = pneg %p1550
      $region86: #{tpu_custom_call.1} parent=5 // pred_check_branch
        %1553 = sbr.rel (%p1551) target = $region88
      $region87: #{tpu_custom_call.1} parent=5 // pred_region
        %s1554 = ssub.s32 %s24, 2
        // Predicated region
        $region89: #{tpu_custom_call.1} parent=87 // pred_check
          %p1555 = pneg %p388
        $region90: #{tpu_custom_call.1} parent=87 // pred_check_branch
          %1557 = sbr.rel (%p1555) target = $region92
        $region91: #{tpu_custom_call.1} parent=87 // pred_region
          %s1558 = sand.u32 %s373, 1
          %s1559 = scalar_lea.sflag [#allocation3], %s1558
          %s1560 = sand.u32 %s373, 1
          %s1561 = smul.addr %s1560, 8
          %s1562 = scalar_lea.vmem [#allocation2], %s1561
          %1563 = dma.done %s1559, 128
        $region92: #{tpu_custom_call.1} parent=87 // pred_fallthru
          _
      $region88: #{tpu_custom_call.1} parent=5 // pred_fallthru
        _
    $region6: #{tpu_custom_call.1} parent=1 // loop_footer
      %s28 = sadd.s32 1, %s24
    $region7: #{tpu_custom_call.1} parent=1 // loop_footer_branch
      %23 = sbr.rel target = $region3
    $region8: #{tpu_custom_call.1} parent=1 // loop_exit
      _
    %1564 = vsyncpa [#allocation3], 1
    %s1565 = scalar_lea.sflag [#allocation3], 1
    %1566 = vsyncpa %s1565, 1

</llo_original>
